<compile_context>
chip_gen: v7x
topology: tpu7x:2x2x1
jax: 0.10.0
libtpu: 0.0.40
codegen_flags: <defaults>
</compile_context>

<pallas_src>
import functools

import jax
import jax.numpy as jnp
from jax.experimental import pallas as pl
from jax.experimental.pallas import tpu as pltpu


def encoder_kernel(x_ref, w_ref, ax_ref, iw_ref, ie_ref, *, T, N, H):
    # x_ref : VMEM (B, T*N)     lane-dense flattened input
    # w_ref : VMEM (N+H+2, 4H)  rows [0:N]=W_ih^T, [N:N+H]=W_hh^T, [N+H]=b, [N+H+1]=[wah|wac|0]
    # ax_ref: SMEM (T+1,)       [wax_0 .. wax_{T-1}, attention bias]
    B = x_ref.shape[0]

    x = x_ref[...]                                        # (B, T*N), resident (~1 vreg here)
    w_x = w_ref[0:N, :]                                   # (N, 4H)
    w_h = w_ref[N:N + H, :]                               # (H, 4H)
    b = w_ref[N + H:N + H + 1, :]                         # (1, 4H)
    wah = w_ref[N + H + 1:N + H + 2, 0:H]                 # (1, H)
    wac = w_ref[N + H + 1:N + H + 2, H:2 * H]             # (1, H)

    # Hoisted, time-invariant attention history term (+ bias), computed in-kernel:
    #   e_pre[b, n] = sum_t wax[t] * x[b, t, n] + ba
    e_pre = jnp.zeros((B, N), jnp.float32) + ax_ref[T]
    for t in range(T):
        e_pre = e_pre + ax_ref[t] * x[:, t * N:(t + 1) * N]

    h = jnp.zeros((B, H), jnp.float32)
    c = jnp.zeros((B, H), jnp.float32)

    # Fully unrolled time loop (T small & static): straight-line code, static lane slices.
    for t in range(T):
        # ---------------- input attention ----------------
        s_h = jnp.sum(h * wah, axis=1, keepdims=True)     # (B, 1)
        s_c = jnp.sum(c * wac, axis=1, keepdims=True)     # (B, 1)
        e = e_pre + s_h + s_c                              # (B, N)

        # softmax over the driving-series axis (matches F.softmax(..., dim=1))
        e = e - jnp.max(e, axis=1, keepdims=True)
        p = jnp.exp(e)
        attn = p / jnp.sum(p, axis=1, keepdims=True)       # exact reciprocal (tiny)

        x_t = x[:, t * N:(t + 1) * N]                      # (B, N) static lane slice
        wx = attn * x_t                                    # (B, N)

        # ---------------- LSTM cell step (two accumulating MXU dots, no concat) --------
        gates = (jnp.dot(wx, w_x, preferred_element_type=jnp.float32)
                 + jnp.dot(h, w_h, preferred_element_type=jnp.float32)
                 + b)                                      # (B, 4H), gate order i|f|g|o
        i_g = jax.nn.sigmoid(gates[:, 0 * H:1 * H])
        f_g = jax.nn.sigmoid(gates[:, 1 * H:2 * H])
        g_g = jnp.tanh(gates[:, 2 * H:3 * H])
        o_g = jax.nn.sigmoid(gates[:, 3 * H:4 * H])
        c = f_g * c + i_g * g_g
        h = o_g * jnp.tanh(c)

        # Stores to the lane-dense output buffers at static lane offsets; the HBM
        # writeback is a single dense DMA per output at kernel end.
        iw_ref[:, t * N:(t + 1) * N] = wx
        ie_ref[:, t * H:(t + 1) * H] = h


@jax.jit
def encoder_forward(x, w_pack, ax_pack):
    """x: (B, T, N) f32; w_pack: (N+H+2, 4H) f32; ax_pack: (T+1,) f32."""
    B, T, N = x.shape
    H = w_pack.shape[1] // 4

    x2d = x.reshape(B, T * N)                              # free row-major reshape

    vmem = pltpu.MemorySpace.VMEM
    smem = pltpu.MemorySpace.SMEM
    iw2d, ie2d = pl.pallas_call(
        functools.partial(encoder_kernel, T=T, N=N, H=H),
        out_shape=(jax.ShapeDtypeStruct((B, T * N), jnp.float32),
                   jax.ShapeDtypeStruct((B, T * H), jnp.float32)),
        in_specs=[pl.BlockSpec(memory_space=vmem),
                  pl.BlockSpec(memory_space=vmem),
                  pl.BlockSpec(memory_space=smem)],
        out_specs=(pl.BlockSpec(memory_space=vmem),
                   pl.BlockSpec(memory_space=vmem)),
    )(x2d, w_pack, ax_pack)

    return iw2d.reshape(B, T, N), ie2d.reshape(B, T, H)


def pack_params(attn_w, attn_b, w_ih, w_hh, b_ih, b_hh, *, T, N, H):
    """One-time (outside jit) packing of all operands into two arrays."""
    w_pack = jnp.zeros((N + H + 2, 4 * H), jnp.float32)
    w_pack = w_pack.at[0:N, :].set(w_ih.T)                          # W_ih^T
    w_pack = w_pack.at[N:N + H, :].set(w_hh.T)                      # W_hh^T
    w_pack = w_pack.at[N + H, :].set(b_ih + b_hh)                   # fused bias
    w_pack = w_pack.at[N + H + 1, 0:H].set(attn_w[0, :H])           # wah
    w_pack = w_pack.at[N + H + 1, H:2 * H].set(attn_w[0, H:2 * H])  # wac
    ax_pack = jnp.concatenate([attn_w[0, 2 * H:], attn_b]).astype(jnp.float32)  # (T+1,)
    return w_pack, ax_pack


def encoder_reference(x, attn_w, attn_b, w_ih, w_hh, b_ih, b_hh):
    """Pure-JAX reference mirroring the PyTorch forward, for verification."""
    B, T, N = x.shape
    H = w_hh.shape[1]
    wah = attn_w[:, :H]                 # (1, H)
    wac = attn_w[:, H:2 * H]            # (1, H)
    wax = attn_w[:, 2 * H:]             # (1, T)
    h = jnp.zeros((B, H), jnp.float32)
    c = jnp.zeros((B, H), jnp.float32)
    b = (b_ih + b_hh).reshape(1, 4 * H)
    iws, ies = [], []
    for t in range(T):
        e = jnp.einsum('btn,ot->bn', x, wax) + h @ wah.T + c @ wac.T + attn_b[0]
        attn = jax.nn.softmax(e, axis=1)
        wx = attn * x[:, t, :]
        gates = wx @ w_ih.T + h @ w_hh.T + b
        i_g = jax.nn.sigmoid(gates[:, :H])
        f_g = jax.nn.sigmoid(gates[:, H:2 * H])
        g_g = jnp.tanh(gates[:, 2 * H:3 * H])
        o_g = jax.nn.sigmoid(gates[:, 3 * H:])
        c = f_g * c + i_g * g_g
        h = o_g * jnp.tanh(c)
        iws.append(wx)
        ies.append(h)
    return jnp.stack(iws, axis=1), jnp.stack(ies, axis=1)


if __name__ == "__main__":
    # Module hyper-parameters (small, consistent with the PyTorch forward pass).
    input_size = 16     # N: number of driving series
    hidden_size = 32    # H
    time_step = 9       # -> sequence length T = time_step - 1 = 8
    batch = 4
    T = time_step - 1
    H = hidden_size
    N = input_size

    key = jax.random.PRNGKey(0)
    k_x, k_aw, k_ab, k_wih, k_whh, k_bih, k_bhh = jax.random.split(key, 7)

    # Input: (batch, time_step-1, input_size), same layout as PyTorch input_data.
    x = jax.random.normal(k_x, (batch, T, N), dtype=jnp.float32)

    # attn_linear: Linear(2H + T -> 1). Feature order of the cat: [hidden | cell | time].
    s_attn = 1.0 / jnp.sqrt(2.0 * H + T)
    attn_w = jax.random.uniform(k_aw, (1, 2 * H + T), jnp.float32, -s_attn, s_attn)
    attn_b = jax.random.uniform(k_ab, (1,), jnp.float32, -s_attn, s_attn)

    # LSTM(input_size -> hidden_size), gate order i|f|g|o, PyTorch parameter shapes.
    s_lstm = 1.0 / jnp.sqrt(float(H))
    w_ih = jax.random.uniform(k_wih, (4 * H, N), jnp.float32, -s_lstm, s_lstm)
    w_hh = jax.random.uniform(k_whh, (4 * H, H), jnp.float32, -s_lstm, s_lstm)
    b_ih = jax.random.uniform(k_bih, (4 * H,), jnp.float32, -s_lstm, s_lstm)
    b_hh = jax.random.uniform(k_bhh, (4 * H,), jnp.float32, -s_lstm, s_lstm)

    # One-time operand packing, outside the jitted per-call path.
    w_pack, ax_pack = pack_params(attn_w, attn_b, w_ih, w_hh, b_ih, b_hh, T=T, N=N, H=H)

    iw, ie = encoder_forward(x, w_pack, ax_pack)
    jax.block_until_ready((iw, ie))

    iw_ref, ie_ref = encoder_reference(x, attn_w, attn_b, w_ih, w_hh, b_ih, b_hh)
    assert iw.shape == (batch, T, N) and ie.shape == (batch, T, H)
    assert jnp.allclose(iw, iw_ref, atol=1e-4, rtol=1e-4)
    assert jnp.allclose(ie, ie_ref, atol=1e-4, rtol=1e-4)

    print("KERNEL_OK")
</pallas_src>

<mosaic_0001>
module attributes {stable_mosaic.version = 11 : i64} {
  func.func @encoder_kernel(%arg0: memref<4x128xf32, #tpu.memory_space<vmem>>, %arg1: memref<50x128xf32, #tpu.memory_space<vmem>>, %arg2: memref<9xf32, #tpu.memory_space<smem>>, %arg3: memref<4x128xf32, #tpu.memory_space<vmem>>, %arg4: memref<4x256xf32, #tpu.memory_space<vmem>>) attributes {dimension_semantics = [], scalar_prefetch = 0 : i64, scratch_operands = 0 : i64, tpu.core_type = #tpu.core_type<tc>} {
    %c0 = arith.constant 0 : index
    %c0_0 = arith.constant 0 : index
    %0 = vector.load %arg0[%c0, %c0_0] : memref<4x128xf32, #tpu.memory_space<vmem>>, vector<4x128xf32>
    %c0_1 = arith.constant 0 : index
    %c0_2 = arith.constant 0 : index
    %1 = vector.load %arg1[%c0_1, %c0_2] : memref<50x128xf32, #tpu.memory_space<vmem>>, vector<16x128xf32>
    %c16 = arith.constant 16 : index
    %c0_3 = arith.constant 0 : index
    %2 = vector.load %arg1[%c16, %c0_3] : memref<50x128xf32, #tpu.memory_space<vmem>>, vector<32x128xf32>
    %c48 = arith.constant 48 : index
    %c0_4 = arith.constant 0 : index
    %3 = vector.load %arg1[%c48, %c0_4] : memref<50x128xf32, #tpu.memory_space<vmem>>, vector<1x128xf32>
    %c49 = arith.constant 49 : index
    %c0_5 = arith.constant 0 : index
    %4 = vector.load %arg1[%c49, %c0_5] : memref<50x128xf32, #tpu.memory_space<vmem>>, vector<1x32xf32>
    %c49_6 = arith.constant 49 : index
    %c32 = arith.constant 32 : index
    %5 = vector.load %arg1[%c49_6, %c32] : memref<50x128xf32, #tpu.memory_space<vmem>>, vector<1x32xf32>
    %cst = arith.constant 0.000000e+00 : f32
    %6 = vector.broadcast %cst : f32 to vector<4x16xf32>
    %c8 = arith.constant 8 : index
    %7 = memref.load %arg2[%c8] : memref<9xf32, #tpu.memory_space<smem>>
    %8 = vector.broadcast %7 : f32 to vector<4x16xf32>
    %9 = arith.addf %6, %8 : vector<4x16xf32>
    %c0_7 = arith.constant 0 : index
    %10 = memref.load %arg2[%c0_7] : memref<9xf32, #tpu.memory_space<smem>>
    %11 = vector.extract_strided_slice %0 {offsets = [0, 0], sizes = [4, 16], strides = [1, 1]} : vector<4x128xf32> to vector<4x16xf32>
    %12 = vector.broadcast %10 : f32 to vector<4x16xf32>
    %13 = arith.mulf %12, %11 : vector<4x16xf32>
    %14 = arith.addf %9, %13 : vector<4x16xf32>
    %c1 = arith.constant 1 : index
    %15 = memref.load %arg2[%c1] : memref<9xf32, #tpu.memory_space<smem>>
    %16 = vector.extract_strided_slice %0 {offsets = [0, 16], sizes = [4, 16], strides = [1, 1]} : vector<4x128xf32> to vector<4x16xf32>
    %17 = vector.broadcast %15 : f32 to vector<4x16xf32>
    %18 = arith.mulf %17, %16 : vector<4x16xf32>
    %19 = arith.addf %14, %18 : vector<4x16xf32>
    %c2 = arith.constant 2 : index
    %20 = memref.load %arg2[%c2] : memref<9xf32, #tpu.memory_space<smem>>
    %21 = vector.extract_strided_slice %0 {offsets = [0, 32], sizes = [4, 16], strides = [1, 1]} : vector<4x128xf32> to vector<4x16xf32>
    %22 = vector.broadcast %20 : f32 to vector<4x16xf32>
    %23 = arith.mulf %22, %21 : vector<4x16xf32>
    %24 = arith.addf %19, %23 : vector<4x16xf32>
    %c3 = arith.constant 3 : index
    %25 = memref.load %arg2[%c3] : memref<9xf32, #tpu.memory_space<smem>>
    %26 = vector.extract_strided_slice %0 {offsets = [0, 48], sizes = [4, 16], strides = [1, 1]} : vector<4x128xf32> to vector<4x16xf32>
    %27 = vector.broadcast %25 : f32 to vector<4x16xf32>
    %28 = arith.mulf %27, %26 : vector<4x16xf32>
    %29 = arith.addf %24, %28 : vector<4x16xf32>
    %c4 = arith.constant 4 : index
    %30 = memref.load %arg2[%c4] : memref<9xf32, #tpu.memory_space<smem>>
    %31 = vector.extract_strided_slice %0 {offsets = [0, 64], sizes = [4, 16], strides = [1, 1]} : vector<4x128xf32> to vector<4x16xf32>
    %32 = vector.broadcast %30 : f32 to vector<4x16xf32>
    %33 = arith.mulf %32, %31 : vector<4x16xf32>
    %34 = arith.addf %29, %33 : vector<4x16xf32>
    %c5 = arith.constant 5 : index
    %35 = memref.load %arg2[%c5] : memref<9xf32, #tpu.memory_space<smem>>
    %36 = vector.extract_strided_slice %0 {offsets = [0, 80], sizes = [4, 16], strides = [1, 1]} : vector<4x128xf32> to vector<4x16xf32>
    %37 = vector.broadcast %35 : f32 to vector<4x16xf32>
    %38 = arith.mulf %37, %36 : vector<4x16xf32>
    %39 = arith.addf %34, %38 : vector<4x16xf32>
    %c6 = arith.constant 6 : index
    %40 = memref.load %arg2[%c6] : memref<9xf32, #tpu.memory_space<smem>>
    %41 = vector.extract_strided_slice %0 {offsets = [0, 96], sizes = [4, 16], strides = [1, 1]} : vector<4x128xf32> to vector<4x16xf32>
    %42 = vector.broadcast %40 : f32 to vector<4x16xf32>
    %43 = arith.mulf %42, %41 : vector<4x16xf32>
    %44 = arith.addf %39, %43 : vector<4x16xf32>
    %c7 = arith.constant 7 : index
    %45 = memref.load %arg2[%c7] : memref<9xf32, #tpu.memory_space<smem>>
    %46 = vector.extract_strided_slice %0 {offsets = [0, 112], sizes = [4, 16], strides = [1, 1]} : vector<4x128xf32> to vector<4x16xf32>
    %47 = vector.broadcast %45 : f32 to vector<4x16xf32>
    %48 = arith.mulf %47, %46 : vector<4x16xf32>
    %49 = arith.addf %44, %48 : vector<4x16xf32>
    %cst_8 = arith.constant 0.000000e+00 : f32
    %50 = vector.broadcast %cst_8 : f32 to vector<4x32xf32>
    %cst_9 = arith.constant 0.000000e+00 : f32
    %51 = vector.broadcast %cst_9 : f32 to vector<4x32xf32>
    %52 = vector.broadcast %4 : vector<1x32xf32> to vector<4x32xf32>
    %53 = arith.mulf %50, %52 : vector<4x32xf32>
    %cst_10 = arith.constant dense<0.000000e+00> : vector<4xf32>
    %54 = vector.multi_reduction <add>, %53, %cst_10 [1] : vector<4x32xf32> to vector<4xf32>
    %55 = vector.shape_cast %54 : vector<4xf32> to vector<4x1xf32>
    %56 = vector.broadcast %5 : vector<1x32xf32> to vector<4x32xf32>
    %57 = arith.mulf %51, %56 : vector<4x32xf32>
    %cst_11 = arith.constant dense<0.000000e+00> : vector<4xf32>
    %58 = vector.multi_reduction <add>, %57, %cst_11 [1] : vector<4x32xf32> to vector<4xf32>
    %59 = vector.shape_cast %58 : vector<4xf32> to vector<4x1xf32>
    %60 = vector.broadcast %55 : vector<4x1xf32> to vector<4x16xf32>
    %61 = arith.addf %49, %60 : vector<4x16xf32>
    %62 = vector.broadcast %59 : vector<4x1xf32> to vector<4x16xf32>
    %63 = arith.addf %61, %62 : vector<4x16xf32>
    %cst_12 = arith.constant dense<0xFF800000> : vector<4xf32>
    %64 = vector.multi_reduction <maximumf>, %63, %cst_12 [1] : vector<4x16xf32> to vector<4xf32>
    %65 = vector.shape_cast %64 : vector<4xf32> to vector<4x1xf32>
    %66 = vector.broadcast %65 : vector<4x1xf32> to vector<4x16xf32>
    %67 = arith.subf %63, %66 : vector<4x16xf32>
    %68 = math.exp %67 : vector<4x16xf32>
    %cst_13 = arith.constant dense<0.000000e+00> : vector<4xf32>
    %69 = vector.multi_reduction <add>, %68, %cst_13 [1] : vector<4x16xf32> to vector<4xf32>
    %70 = vector.shape_cast %69 : vector<4xf32> to vector<4x1xf32>
    %71 = vector.broadcast %70 : vector<4x1xf32> to vector<4x16xf32>
    %72 = arith.divf %68, %71 : vector<4x16xf32>
    %73 = vector.extract_strided_slice %0 {offsets = [0, 0], sizes = [4, 16], strides = [1, 1]} : vector<4x128xf32> to vector<4x16xf32>
    %74 = arith.mulf %72, %73 : vector<4x16xf32>
    %cst_14 = arith.constant dense<0.000000e+00> : vector<4x128xf32>
    %75 = tpu.matmul %74, %1, %cst_14 {dimension_numbers = #tpu.dot_dimension_numbers<[1], [0], [0], [1], [0, 0, 1, 1], [], []>} : vector<4x16xf32>, vector<16x128xf32>, vector<4x128xf32> -> vector<4x128xf32>
    %cst_15 = arith.constant dense<0.000000e+00> : vector<4x128xf32>
    %76 = tpu.matmul %50, %2, %cst_15 {dimension_numbers = #tpu.dot_dimension_numbers<[1], [0], [0], [1], [0, 0, 1, 1], [], []>} : vector<4x32xf32>, vector<32x128xf32>, vector<4x128xf32> -> vector<4x128xf32>
    %77 = arith.addf %75, %76 : vector<4x128xf32>
    %78 = vector.broadcast %3 : vector<1x128xf32> to vector<4x128xf32>
    %79 = arith.addf %77, %78 : vector<4x128xf32>
    %80 = vector.extract_strided_slice %79 {offsets = [0, 0], sizes = [4, 32], strides = [1, 1]} : vector<4x128xf32> to vector<4x32xf32>
    %81 = arith.negf %80 : vector<4x32xf32>
    %82 = math.exp %81 : vector<4x32xf32>
    %cst_16 = arith.constant 1.000000e+00 : f32
    %83 = vector.broadcast %cst_16 : f32 to vector<4x32xf32>
    %84 = arith.addf %83, %82 : vector<4x32xf32>
    %85 = arith.divf %83, %84 : vector<4x32xf32>
    %86 = vector.extract_strided_slice %79 {offsets = [0, 32], sizes = [4, 32], strides = [1, 1]} : vector<4x128xf32> to vector<4x32xf32>
    %87 = arith.negf %86 : vector<4x32xf32>
    %88 = math.exp %87 : vector<4x32xf32>
    %cst_17 = arith.constant 1.000000e+00 : f32
    %89 = vector.broadcast %cst_17 : f32 to vector<4x32xf32>
    %90 = arith.addf %89, %88 : vector<4x32xf32>
    %91 = arith.divf %89, %90 : vector<4x32xf32>
    %92 = vector.extract_strided_slice %79 {offsets = [0, 64], sizes = [4, 32], strides = [1, 1]} : vector<4x128xf32> to vector<4x32xf32>
    %93 = math.tanh %92 : vector<4x32xf32>
    %94 = vector.extract_strided_slice %79 {offsets = [0, 96], sizes = [4, 32], strides = [1, 1]} : vector<4x128xf32> to vector<4x32xf32>
    %95 = arith.negf %94 : vector<4x32xf32>
    %96 = math.exp %95 : vector<4x32xf32>
    %cst_18 = arith.constant 1.000000e+00 : f32
    %97 = vector.broadcast %cst_18 : f32 to vector<4x32xf32>
    %98 = arith.addf %97, %96 : vector<4x32xf32>
    %99 = arith.divf %97, %98 : vector<4x32xf32>
    %100 = arith.mulf %91, %51 : vector<4x32xf32>
    %101 = arith.mulf %85, %93 : vector<4x32xf32>
    %102 = arith.addf %100, %101 : vector<4x32xf32>
    %103 = math.tanh %102 : vector<4x32xf32>
    %104 = arith.mulf %99, %103 : vector<4x32xf32>
    %c0_19 = arith.constant 0 : index
    %c0_20 = arith.constant 0 : index
    %105 = vector.load %arg3[%c0_19, %c0_20] : memref<4x128xf32, #tpu.memory_space<vmem>>, vector<4x16xf32>
    tpu.vector_store %arg3[%c0_19, %c0_20], %74 {strides = array<i32>} : memref<4x128xf32, #tpu.memory_space<vmem>>, vector<4x16xf32>,
    %c0_21 = arith.constant 0 : index
    %c0_22 = arith.constant 0 : index
    %106 = vector.load %arg4[%c0_21, %c0_22] : memref<4x256xf32, #tpu.memory_space<vmem>>, vector<4x32xf32>
    tpu.vector_store %arg4[%c0_21, %c0_22], %104 {strides = array<i32>} : memref<4x256xf32, #tpu.memory_space<vmem>>, vector<4x32xf32>,
    %107 = vector.broadcast %4 : vector<1x32xf32> to vector<4x32xf32>
    %108 = arith.mulf %104, %107 : vector<4x32xf32>
    %cst_23 = arith.constant dense<0.000000e+00> : vector<4xf32>
    %109 = vector.multi_reduction <add>, %108, %cst_23 [1] : vector<4x32xf32> to vector<4xf32>
    %110 = vector.shape_cast %109 : vector<4xf32> to vector<4x1xf32>
    %111 = vector.broadcast %5 : vector<1x32xf32> to vector<4x32xf32>
    %112 = arith.mulf %102, %111 : vector<4x32xf32>
    %cst_24 = arith.constant dense<0.000000e+00> : vector<4xf32>
    %113 = vector.multi_reduction <add>, %112, %cst_24 [1] : vector<4x32xf32> to vector<4xf32>
    %114 = vector.shape_cast %113 : vector<4xf32> to vector<4x1xf32>
    %115 = vector.broadcast %110 : vector<4x1xf32> to vector<4x16xf32>
    %116 = arith.addf %49, %115 : vector<4x16xf32>
    %117 = vector.broadcast %114 : vector<4x1xf32> to vector<4x16xf32>
    %118 = arith.addf %116, %117 : vector<4x16xf32>
    %cst_25 = arith.constant dense<0xFF800000> : vector<4xf32>
    %119 = vector.multi_reduction <maximumf>, %118, %cst_25 [1] : vector<4x16xf32> to vector<4xf32>
    %120 = vector.shape_cast %119 : vector<4xf32> to vector<4x1xf32>
    %121 = vector.broadcast %120 : vector<4x1xf32> to vector<4x16xf32>
    %122 = arith.subf %118, %121 : vector<4x16xf32>
    %123 = math.exp %122 : vector<4x16xf32>
    %cst_26 = arith.constant dense<0.000000e+00> : vector<4xf32>
    %124 = vector.multi_reduction <add>, %123, %cst_26 [1] : vector<4x16xf32> to vector<4xf32>
    %125 = vector.shape_cast %124 : vector<4xf32> to vector<4x1xf32>
    %126 = vector.broadcast %125 : vector<4x1xf32> to vector<4x16xf32>
    %127 = arith.divf %123, %126 : vector<4x16xf32>
    %128 = vector.extract_strided_slice %0 {offsets = [0, 16], sizes = [4, 16], strides = [1, 1]} : vector<4x128xf32> to vector<4x16xf32>
    %129 = arith.mulf %127, %128 : vector<4x16xf32>
    %cst_27 = arith.constant dense<0.000000e+00> : vector<4x128xf32>
    %130 = tpu.matmul %129, %1, %cst_27 {dimension_numbers = #tpu.dot_dimension_numbers<[1], [0], [0], [1], [0, 0, 1, 1], [], []>} : vector<4x16xf32>, vector<16x128xf32>, vector<4x128xf32> -> vector<4x128xf32>
    %cst_28 = arith.constant dense<0.000000e+00> : vector<4x128xf32>
    %131 = tpu.matmul %104, %2, %cst_28 {dimension_numbers = #tpu.dot_dimension_numbers<[1], [0], [0], [1], [0, 0, 1, 1], [], []>} : vector<4x32xf32>, vector<32x128xf32>, vector<4x128xf32> -> vector<4x128xf32>
    %132 = arith.addf %130, %131 : vector<4x128xf32>
    %133 = vector.broadcast %3 : vector<1x128xf32> to vector<4x128xf32>
    %134 = arith.addf %132, %133 : vector<4x128xf32>
    %135 = vector.extract_strided_slice %134 {offsets = [0, 0], sizes = [4, 32], strides = [1, 1]} : vector<4x128xf32> to vector<4x32xf32>
    %136 = arith.negf %135 : vector<4x32xf32>
    %137 = math.exp %136 : vector<4x32xf32>
    %cst_29 = arith.constant 1.000000e+00 : f32
    %138 = vector.broadcast %cst_29 : f32 to vector<4x32xf32>
    %139 = arith.addf %138, %137 : vector<4x32xf32>
    %140 = arith.divf %138, %139 : vector<4x32xf32>
    %141 = vector.extract_strided_slice %134 {offsets = [0, 32], sizes = [4, 32], strides = [1, 1]} : vector<4x128xf32> to vector<4x32xf32>
    %142 = arith.negf %141 : vector<4x32xf32>
    %143 = math.exp %142 : vector<4x32xf32>
    %cst_30 = arith.constant 1.000000e+00 : f32
    %144 = vector.broadcast %cst_30 : f32 to vector<4x32xf32>
    %145 = arith.addf %144, %143 : vector<4x32xf32>
    %146 = arith.divf %144, %145 : vector<4x32xf32>
    %147 = vector.extract_strided_slice %134 {offsets = [0, 64], sizes = [4, 32], strides = [1, 1]} : vector<4x128xf32> to vector<4x32xf32>
    %148 = math.tanh %147 : vector<4x32xf32>
    %149 = vector.extract_strided_slice %134 {offsets = [0, 96], sizes = [4, 32], strides = [1, 1]} : vector<4x128xf32> to vector<4x32xf32>
    %150 = arith.negf %149 : vector<4x32xf32>
    %151 = math.exp %150 : vector<4x32xf32>
    %cst_31 = arith.constant 1.000000e+00 : f32
    %152 = vector.broadcast %cst_31 : f32 to vector<4x32xf32>
    %153 = arith.addf %152, %151 : vector<4x32xf32>
    %154 = arith.divf %152, %153 : vector<4x32xf32>
    %155 = arith.mulf %146, %102 : vector<4x32xf32>
    %156 = arith.mulf %140, %148 : vector<4x32xf32>
    %157 = arith.addf %155, %156 : vector<4x32xf32>
    %158 = math.tanh %157 : vector<4x32xf32>
    %159 = arith.mulf %154, %158 : vector<4x32xf32>
    %c0_32 = arith.constant 0 : index
    %c16_33 = arith.constant 16 : index
    %160 = vector.load %arg3[%c0_32, %c16_33] : memref<4x128xf32, #tpu.memory_space<vmem>>, vector<4x16xf32>
    tpu.vector_store %arg3[%c0_32, %c16_33], %129 {strides = array<i32>} : memref<4x128xf32, #tpu.memory_space<vmem>>, vector<4x16xf32>,
    %c0_34 = arith.constant 0 : index
    %c32_35 = arith.constant 32 : index
    %161 = vector.load %arg4[%c0_34, %c32_35] : memref<4x256xf32, #tpu.memory_space<vmem>>, vector<4x32xf32>
    tpu.vector_store %arg4[%c0_34, %c32_35], %159 {strides = array<i32>} : memref<4x256xf32, #tpu.memory_space<vmem>>, vector<4x32xf32>,
    %162 = vector.broadcast %4 : vector<1x32xf32> to vector<4x32xf32>
    %163 = arith.mulf %159, %162 : vector<4x32xf32>
    %cst_36 = arith.constant dense<0.000000e+00> : vector<4xf32>
    %164 = vector.multi_reduction <add>, %163, %cst_36 [1] : vector<4x32xf32> to vector<4xf32>
    %165 = vector.shape_cast %164 : vector<4xf32> to vector<4x1xf32>
    %166 = vector.broadcast %5 : vector<1x32xf32> to vector<4x32xf32>
    %167 = arith.mulf %157, %166 : vector<4x32xf32>
    %cst_37 = arith.constant dense<0.000000e+00> : vector<4xf32>
    %168 = vector.multi_reduction <add>, %167, %cst_37 [1] : vector<4x32xf32> to vector<4xf32>
    %169 = vector.shape_cast %168 : vector<4xf32> to vector<4x1xf32>
    %170 = vector.broadcast %165 : vector<4x1xf32> to vector<4x16xf32>
    %171 = arith.addf %49, %170 : vector<4x16xf32>
    %172 = vector.broadcast %169 : vector<4x1xf32> to vector<4x16xf32>
    %173 = arith.addf %171, %172 : vector<4x16xf32>
    %cst_38 = arith.constant dense<0xFF800000> : vector<4xf32>
    %174 = vector.multi_reduction <maximumf>, %173, %cst_38 [1] : vector<4x16xf32> to vector<4xf32>
    %175 = vector.shape_cast %174 : vector<4xf32> to vector<4x1xf32>
    %176 = vector.broadcast %175 : vector<4x1xf32> to vector<4x16xf32>
    %177 = arith.subf %173, %176 : vector<4x16xf32>
    %178 = math.exp %177 : vector<4x16xf32>
    %cst_39 = arith.constant dense<0.000000e+00> : vector<4xf32>
    %179 = vector.multi_reduction <add>, %178, %cst_39 [1] : vector<4x16xf32> to vector<4xf32>
    %180 = vector.shape_cast %179 : vector<4xf32> to vector<4x1xf32>
    %181 = vector.broadcast %180 : vector<4x1xf32> to vector<4x16xf32>
    %182 = arith.divf %178, %181 : vector<4x16xf32>
    %183 = vector.extract_strided_slice %0 {offsets = [0, 32], sizes = [4, 16], strides = [1, 1]} : vector<4x128xf32> to vector<4x16xf32>
    %184 = arith.mulf %182, %183 : vector<4x16xf32>
    %cst_40 = arith.constant dense<0.000000e+00> : vector<4x128xf32>
    %185 = tpu.matmul %184, %1, %cst_40 {dimension_numbers = #tpu.dot_dimension_numbers<[1], [0], [0], [1], [0, 0, 1, 1], [], []>} : vector<4x16xf32>, vector<16x128xf32>, vector<4x128xf32> -> vector<4x128xf32>
    %cst_41 = arith.constant dense<0.000000e+00> : vector<4x128xf32>
    %186 = tpu.matmul %159, %2, %cst_41 {dimension_numbers = #tpu.dot_dimension_numbers<[1], [0], [0], [1], [0, 0, 1, 1], [], []>} : vector<4x32xf32>, vector<32x128xf32>, vector<4x128xf32> -> vector<4x128xf32>
    %187 = arith.addf %185, %186 : vector<4x128xf32>
    %188 = vector.broadcast %3 : vector<1x128xf32> to vector<4x128xf32>
    %189 = arith.addf %187, %188 : vector<4x128xf32>
    %190 = vector.extract_strided_slice %189 {offsets = [0, 0], sizes = [4, 32], strides = [1, 1]} : vector<4x128xf32> to vector<4x32xf32>
    %191 = arith.negf %190 : vector<4x32xf32>
    %192 = math.exp %191 : vector<4x32xf32>
    %cst_42 = arith.constant 1.000000e+00 : f32
    %193 = vector.broadcast %cst_42 : f32 to vector<4x32xf32>
    %194 = arith.addf %193, %192 : vector<4x32xf32>
    %195 = arith.divf %193, %194 : vector<4x32xf32>
    %196 = vector.extract_strided_slice %189 {offsets = [0, 32], sizes = [4, 32], strides = [1, 1]} : vector<4x128xf32> to vector<4x32xf32>
    %197 = arith.negf %196 : vector<4x32xf32>
    %198 = math.exp %197 : vector<4x32xf32>
    %cst_43 = arith.constant 1.000000e+00 : f32
    %199 = vector.broadcast %cst_43 : f32 to vector<4x32xf32>
    %200 = arith.addf %199, %198 : vector<4x32xf32>
    %201 = arith.divf %199, %200 : vector<4x32xf32>
    %202 = vector.extract_strided_slice %189 {offsets = [0, 64], sizes = [4, 32], strides = [1, 1]} : vector<4x128xf32> to vector<4x32xf32>
    %203 = math.tanh %202 : vector<4x32xf32>
    %204 = vector.extract_strided_slice %189 {offsets = [0, 96], sizes = [4, 32], strides = [1, 1]} : vector<4x128xf32> to vector<4x32xf32>
    %205 = arith.negf %204 : vector<4x32xf32>
    %206 = math.exp %205 : vector<4x32xf32>
    %cst_44 = arith.constant 1.000000e+00 : f32
    %207 = vector.broadcast %cst_44 : f32 to vector<4x32xf32>
    %208 = arith.addf %207, %206 : vector<4x32xf32>
    %209 = arith.divf %207, %208 : vector<4x32xf32>
    %210 = arith.mulf %201, %157 : vector<4x32xf32>
    %211 = arith.mulf %195, %203 : vector<4x32xf32>
    %212 = arith.addf %210, %211 : vector<4x32xf32>
    %213 = math.tanh %212 : vector<4x32xf32>
    %214 = arith.mulf %209, %213 : vector<4x32xf32>
    %c0_45 = arith.constant 0 : index
    %c32_46 = arith.constant 32 : index
    %215 = vector.load %arg3[%c0_45, %c32_46] : memref<4x128xf32, #tpu.memory_space<vmem>>, vector<4x16xf32>
    tpu.vector_store %arg3[%c0_45, %c32_46], %184 {strides = array<i32>} : memref<4x128xf32, #tpu.memory_space<vmem>>, vector<4x16xf32>,
    %c0_47 = arith.constant 0 : index
    %c64 = arith.constant 64 : index
    %216 = vector.load %arg4[%c0_47, %c64] : memref<4x256xf32, #tpu.memory_space<vmem>>, vector<4x32xf32>
    tpu.vector_store %arg4[%c0_47, %c64], %214 {strides = array<i32>} : memref<4x256xf32, #tpu.memory_space<vmem>>, vector<4x32xf32>,
    %217 = vector.broadcast %4 : vector<1x32xf32> to vector<4x32xf32>
    %218 = arith.mulf %214, %217 : vector<4x32xf32>
    %cst_48 = arith.constant dense<0.000000e+00> : vector<4xf32>
    %219 = vector.multi_reduction <add>, %218, %cst_48 [1] : vector<4x32xf32> to vector<4xf32>
    %220 = vector.shape_cast %219 : vector<4xf32> to vector<4x1xf32>
    %221 = vector.broadcast %5 : vector<1x32xf32> to vector<4x32xf32>
    %222 = arith.mulf %212, %221 : vector<4x32xf32>
    %cst_49 = arith.constant dense<0.000000e+00> : vector<4xf32>
    %223 = vector.multi_reduction <add>, %222, %cst_49 [1] : vector<4x32xf32> to vector<4xf32>
    %224 = vector.shape_cast %223 : vector<4xf32> to vector<4x1xf32>
    %225 = vector.broadcast %220 : vector<4x1xf32> to vector<4x16xf32>
    %226 = arith.addf %49, %225 : vector<4x16xf32>
    %227 = vector.broadcast %224 : vector<4x1xf32> to vector<4x16xf32>
    %228 = arith.addf %226, %227 : vector<4x16xf32>
    %cst_50 = arith.constant dense<0xFF800000> : vector<4xf32>
    %229 = vector.multi_reduction <maximumf>, %228, %cst_50 [1] : vector<4x16xf32> to vector<4xf32>
    %230 = vector.shape_cast %229 : vector<4xf32> to vector<4x1xf32>
    %231 = vector.broadcast %230 : vector<4x1xf32> to vector<4x16xf32>
    %232 = arith.subf %228, %231 : vector<4x16xf32>
    %233 = math.exp %232 : vector<4x16xf32>
    %cst_51 = arith.constant dense<0.000000e+00> : vector<4xf32>
    %234 = vector.multi_reduction <add>, %233, %cst_51 [1] : vector<4x16xf32> to vector<4xf32>
    %235 = vector.shape_cast %234 : vector<4xf32> to vector<4x1xf32>
    %236 = vector.broadcast %235 : vector<4x1xf32> to vector<4x16xf32>
    %237 = arith.divf %233, %236 : vector<4x16xf32>
    %238 = vector.extract_strided_slice %0 {offsets = [0, 48], sizes = [4, 16], strides = [1, 1]} : vector<4x128xf32> to vector<4x16xf32>
    %239 = arith.mulf %237, %238 : vector<4x16xf32>
    %cst_52 = arith.constant dense<0.000000e+00> : vector<4x128xf32>
    %240 = tpu.matmul %239, %1, %cst_52 {dimension_numbers = #tpu.dot_dimension_numbers<[1], [0], [0], [1], [0, 0, 1, 1], [], []>} : vector<4x16xf32>, vector<16x128xf32>, vector<4x128xf32> -> vector<4x128xf32>
    %cst_53 = arith.constant dense<0.000000e+00> : vector<4x128xf32>
    %241 = tpu.matmul %214, %2, %cst_53 {dimension_numbers = #tpu.dot_dimension_numbers<[1], [0], [0], [1], [0, 0, 1, 1], [], []>} : vector<4x32xf32>, vector<32x128xf32>, vector<4x128xf32> -> vector<4x128xf32>
    %242 = arith.addf %240, %241 : vector<4x128xf32>
    %243 = vector.broadcast %3 : vector<1x128xf32> to vector<4x128xf32>
    %244 = arith.addf %242, %243 : vector<4x128xf32>
    %245 = vector.extract_strided_slice %244 {offsets = [0, 0], sizes = [4, 32], strides = [1, 1]} : vector<4x128xf32> to vector<4x32xf32>
    %246 = arith.negf %245 : vector<4x32xf32>
    %247 = math.exp %246 : vector<4x32xf32>
    %cst_54 = arith.constant 1.000000e+00 : f32
    %248 = vector.broadcast %cst_54 : f32 to vector<4x32xf32>
    %249 = arith.addf %248, %247 : vector<4x32xf32>
    %250 = arith.divf %248, %249 : vector<4x32xf32>
    %251 = vector.extract_strided_slice %244 {offsets = [0, 32], sizes = [4, 32], strides = [1, 1]} : vector<4x128xf32> to vector<4x32xf32>
    %252 = arith.negf %251 : vector<4x32xf32>
    %253 = math.exp %252 : vector<4x32xf32>
    %cst_55 = arith.constant 1.000000e+00 : f32
    %254 = vector.broadcast %cst_55 : f32 to vector<4x32xf32>
    %255 = arith.addf %254, %253 : vector<4x32xf32>
    %256 = arith.divf %254, %255 : vector<4x32xf32>
    %257 = vector.extract_strided_slice %244 {offsets = [0, 64], sizes = [4, 32], strides = [1, 1]} : vector<4x128xf32> to vector<4x32xf32>
    %258 = math.tanh %257 : vector<4x32xf32>
    %259 = vector.extract_strided_slice %244 {offsets = [0, 96], sizes = [4, 32], strides = [1, 1]} : vector<4x128xf32> to vector<4x32xf32>
    %260 = arith.negf %259 : vector<4x32xf32>
    %261 = math.exp %260 : vector<4x32xf32>
    %cst_56 = arith.constant 1.000000e+00 : f32
    %262 = vector.broadcast %cst_56 : f32 to vector<4x32xf32>
    %263 = arith.addf %262, %261 : vector<4x32xf32>
    %264 = arith.divf %262, %263 : vector<4x32xf32>
    %265 = arith.mulf %256, %212 : vector<4x32xf32>
    %266 = arith.mulf %250, %258 : vector<4x32xf32>
    %267 = arith.addf %265, %266 : vector<4x32xf32>
    %268 = math.tanh %267 : vector<4x32xf32>
    %269 = arith.mulf %264, %268 : vector<4x32xf32>
    %c0_57 = arith.constant 0 : index
    %c48_58 = arith.constant 48 : index
    %270 = vector.load %arg3[%c0_57, %c48_58] : memref<4x128xf32, #tpu.memory_space<vmem>>, vector<4x16xf32>
    tpu.vector_store %arg3[%c0_57, %c48_58], %239 {strides = array<i32>} : memref<4x128xf32, #tpu.memory_space<vmem>>, vector<4x16xf32>,
    %c0_59 = arith.constant 0 : index
    %c96 = arith.constant 96 : index
    %271 = vector.load %arg4[%c0_59, %c96] : memref<4x256xf32, #tpu.memory_space<vmem>>, vector<4x32xf32>
    tpu.vector_store %arg4[%c0_59, %c96], %269 {strides = array<i32>} : memref<4x256xf32, #tpu.memory_space<vmem>>, vector<4x32xf32>,
    %272 = vector.broadcast %4 : vector<1x32xf32> to vector<4x32xf32>
    %273 = arith.mulf %269, %272 : vector<4x32xf32>
    %cst_60 = arith.constant dense<0.000000e+00> : vector<4xf32>
    %274 = vector.multi_reduction <add>, %273, %cst_60 [1] : vector<4x32xf32> to vector<4xf32>
    %275 = vector.shape_cast %274 : vector<4xf32> to vector<4x1xf32>
    %276 = vector.broadcast %5 : vector<1x32xf32> to vector<4x32xf32>
    %277 = arith.mulf %267, %276 : vector<4x32xf32>
    %cst_61 = arith.constant dense<0.000000e+00> : vector<4xf32>
    %278 = vector.multi_reduction <add>, %277, %cst_61 [1] : vector<4x32xf32> to vector<4xf32>
    %279 = vector.shape_cast %278 : vector<4xf32> to vector<4x1xf32>
    %280 = vector.broadcast %275 : vector<4x1xf32> to vector<4x16xf32>
    %281 = arith.addf %49, %280 : vector<4x16xf32>
    %282 = vector.broadcast %279 : vector<4x1xf32> to vector<4x16xf32>
    %283 = arith.addf %281, %282 : vector<4x16xf32>
    %cst_62 = arith.constant dense<0xFF800000> : vector<4xf32>
    %284 = vector.multi_reduction <maximumf>, %283, %cst_62 [1] : vector<4x16xf32> to vector<4xf32>
    %285 = vector.shape_cast %284 : vector<4xf32> to vector<4x1xf32>
    %286 = vector.broadcast %285 : vector<4x1xf32> to vector<4x16xf32>
    %287 = arith.subf %283, %286 : vector<4x16xf32>
    %288 = math.exp %287 : vector<4x16xf32>
    %cst_63 = arith.constant dense<0.000000e+00> : vector<4xf32>
    %289 = vector.multi_reduction <add>, %288, %cst_63 [1] : vector<4x16xf32> to vector<4xf32>
    %290 = vector.shape_cast %289 : vector<4xf32> to vector<4x1xf32>
    %291 = vector.broadcast %290 : vector<4x1xf32> to vector<4x16xf32>
    %292 = arith.divf %288, %291 : vector<4x16xf32>
    %293 = vector.extract_strided_slice %0 {offsets = [0, 64], sizes = [4, 16], strides = [1, 1]} : vector<4x128xf32> to vector<4x16xf32>
    %294 = arith.mulf %292, %293 : vector<4x16xf32>
    %cst_64 = arith.constant dense<0.000000e+00> : vector<4x128xf32>
    %295 = tpu.matmul %294, %1, %cst_64 {dimension_numbers = #tpu.dot_dimension_numbers<[1], [0], [0], [1], [0, 0, 1, 1], [], []>} : vector<4x16xf32>, vector<16x128xf32>, vector<4x128xf32> -> vector<4x128xf32>
    %cst_65 = arith.constant dense<0.000000e+00> : vector<4x128xf32>
    %296 = tpu.matmul %269, %2, %cst_65 {dimension_numbers = #tpu.dot_dimension_numbers<[1], [0], [0], [1], [0, 0, 1, 1], [], []>} : vector<4x32xf32>, vector<32x128xf32>, vector<4x128xf32> -> vector<4x128xf32>
    %297 = arith.addf %295, %296 : vector<4x128xf32>
    %298 = vector.broadcast %3 : vector<1x128xf32> to vector<4x128xf32>
    %299 = arith.addf %297, %298 : vector<4x128xf32>
    %300 = vector.extract_strided_slice %299 {offsets = [0, 0], sizes = [4, 32], strides = [1, 1]} : vector<4x128xf32> to vector<4x32xf32>
    %301 = arith.negf %300 : vector<4x32xf32>
    %302 = math.exp %301 : vector<4x32xf32>
    %cst_66 = arith.constant 1.000000e+00 : f32
    %303 = vector.broadcast %cst_66 : f32 to vector<4x32xf32>
    %304 = arith.addf %303, %302 : vector<4x32xf32>
    %305 = arith.divf %303, %304 : vector<4x32xf32>
    %306 = vector.extract_strided_slice %299 {offsets = [0, 32], sizes = [4, 32], strides = [1, 1]} : vector<4x128xf32> to vector<4x32xf32>
    %307 = arith.negf %306 : vector<4x32xf32>
    %308 = math.exp %307 : vector<4x32xf32>
    %cst_67 = arith.constant 1.000000e+00 : f32
    %309 = vector.broadcast %cst_67 : f32 to vector<4x32xf32>
    %310 = arith.addf %309, %308 : vector<4x32xf32>
    %311 = arith.divf %309, %310 : vector<4x32xf32>
    %312 = vector.extract_strided_slice %299 {offsets = [0, 64], sizes = [4, 32], strides = [1, 1]} : vector<4x128xf32> to vector<4x32xf32>
    %313 = math.tanh %312 : vector<4x32xf32>
    %314 = vector.extract_strided_slice %299 {offsets = [0, 96], sizes = [4, 32], strides = [1, 1]} : vector<4x128xf32> to vector<4x32xf32>
    %315 = arith.negf %314 : vector<4x32xf32>
    %316 = math.exp %315 : vector<4x32xf32>
    %cst_68 = arith.constant 1.000000e+00 : f32
    %317 = vector.broadcast %cst_68 : f32 to vector<4x32xf32>
    %318 = arith.addf %317, %316 : vector<4x32xf32>
    %319 = arith.divf %317, %318 : vector<4x32xf32>
    %320 = arith.mulf %311, %267 : vector<4x32xf32>
    %321 = arith.mulf %305, %313 : vector<4x32xf32>
    %322 = arith.addf %320, %321 : vector<4x32xf32>
    %323 = math.tanh %322 : vector<4x32xf32>
    %324 = arith.mulf %319, %323 : vector<4x32xf32>
    %c0_69 = arith.constant 0 : index
    %c64_70 = arith.constant 64 : index
    %325 = vector.load %arg3[%c0_69, %c64_70] : memref<4x128xf32, #tpu.memory_space<vmem>>, vector<4x16xf32>
    tpu.vector_store %arg3[%c0_69, %c64_70], %294 {strides = array<i32>} : memref<4x128xf32, #tpu.memory_space<vmem>>, vector<4x16xf32>,
    %c0_71 = arith.constant 0 : index
    %c128 = arith.constant 128 : index
    %326 = vector.load %arg4[%c0_71, %c128] : memref<4x256xf32, #tpu.memory_space<vmem>>, vector<4x32xf32>
    tpu.vector_store %arg4[%c0_71, %c128], %324 {strides = array<i32>} : memref<4x256xf32, #tpu.memory_space<vmem>>, vector<4x32xf32>,
    %327 = vector.broadcast %4 : vector<1x32xf32> to vector<4x32xf32>
    %328 = arith.mulf %324, %327 : vector<4x32xf32>
    %cst_72 = arith.constant dense<0.000000e+00> : vector<4xf32>
    %329 = vector.multi_reduction <add>, %328, %cst_72 [1] : vector<4x32xf32> to vector<4xf32>
    %330 = vector.shape_cast %329 : vector<4xf32> to vector<4x1xf32>
    %331 = vector.broadcast %5 : vector<1x32xf32> to vector<4x32xf32>
    %332 = arith.mulf %322, %331 : vector<4x32xf32>
    %cst_73 = arith.constant dense<0.000000e+00> : vector<4xf32>
    %333 = vector.multi_reduction <add>, %332, %cst_73 [1] : vector<4x32xf32> to vector<4xf32>
    %334 = vector.shape_cast %333 : vector<4xf32> to vector<4x1xf32>
    %335 = vector.broadcast %330 : vector<4x1xf32> to vector<4x16xf32>
    %336 = arith.addf %49, %335 : vector<4x16xf32>
    %337 = vector.broadcast %334 : vector<4x1xf32> to vector<4x16xf32>
    %338 = arith.addf %336, %337 : vector<4x16xf32>
    %cst_74 = arith.constant dense<0xFF800000> : vector<4xf32>
    %339 = vector.multi_reduction <maximumf>, %338, %cst_74 [1] : vector<4x16xf32> to vector<4xf32>
    %340 = vector.shape_cast %339 : vector<4xf32> to vector<4x1xf32>
    %341 = vector.broadcast %340 : vector<4x1xf32> to vector<4x16xf32>
    %342 = arith.subf %338, %341 : vector<4x16xf32>
    %343 = math.exp %342 : vector<4x16xf32>
    %cst_75 = arith.constant dense<0.000000e+00> : vector<4xf32>
    %344 = vector.multi_reduction <add>, %343, %cst_75 [1] : vector<4x16xf32> to vector<4xf32>
    %345 = vector.shape_cast %344 : vector<4xf32> to vector<4x1xf32>
    %346 = vector.broadcast %345 : vector<4x1xf32> to vector<4x16xf32>
    %347 = arith.divf %343, %346 : vector<4x16xf32>
    %348 = vector.extract_strided_slice %0 {offsets = [0, 80], sizes = [4, 16], strides = [1, 1]} : vector<4x128xf32> to vector<4x16xf32>
    %349 = arith.mulf %347, %348 : vector<4x16xf32>
    %cst_76 = arith.constant dense<0.000000e+00> : vector<4x128xf32>
    %350 = tpu.matmul %349, %1, %cst_76 {dimension_numbers = #tpu.dot_dimension_numbers<[1], [0], [0], [1], [0, 0, 1, 1], [], []>} : vector<4x16xf32>, vector<16x128xf32>, vector<4x128xf32> -> vector<4x128xf32>
    %cst_77 = arith.constant dense<0.000000e+00> : vector<4x128xf32>
    %351 = tpu.matmul %324, %2, %cst_77 {dimension_numbers = #tpu.dot_dimension_numbers<[1], [0], [0], [1], [0, 0, 1, 1], [], []>} : vector<4x32xf32>, vector<32x128xf32>, vector<4x128xf32> -> vector<4x128xf32>
    %352 = arith.addf %350, %351 : vector<4x128xf32>
    %353 = vector.broadcast %3 : vector<1x128xf32> to vector<4x128xf32>
    %354 = arith.addf %352, %353 : vector<4x128xf32>
    %355 = vector.extract_strided_slice %354 {offsets = [0, 0], sizes = [4, 32], strides = [1, 1]} : vector<4x128xf32> to vector<4x32xf32>
    %356 = arith.negf %355 : vector<4x32xf32>
    %357 = math.exp %356 : vector<4x32xf32>
    %cst_78 = arith.constant 1.000000e+00 : f32
    %358 = vector.broadcast %cst_78 : f32 to vector<4x32xf32>
    %359 = arith.addf %358, %357 : vector<4x32xf32>
    %360 = arith.divf %358, %359 : vector<4x32xf32>
    %361 = vector.extract_strided_slice %354 {offsets = [0, 32], sizes = [4, 32], strides = [1, 1]} : vector<4x128xf32> to vector<4x32xf32>
    %362 = arith.negf %361 : vector<4x32xf32>
    %363 = math.exp %362 : vector<4x32xf32>
    %cst_79 = arith.constant 1.000000e+00 : f32
    %364 = vector.broadcast %cst_79 : f32 to vector<4x32xf32>
    %365 = arith.addf %364, %363 : vector<4x32xf32>
    %366 = arith.divf %364, %365 : vector<4x32xf32>
    %367 = vector.extract_strided_slice %354 {offsets = [0, 64], sizes = [4, 32], strides = [1, 1]} : vector<4x128xf32> to vector<4x32xf32>
    %368 = math.tanh %367 : vector<4x32xf32>
    %369 = vector.extract_strided_slice %354 {offsets = [0, 96], sizes = [4, 32], strides = [1, 1]} : vector<4x128xf32> to vector<4x32xf32>
    %370 = arith.negf %369 : vector<4x32xf32>
    %371 = math.exp %370 : vector<4x32xf32>
    %cst_80 = arith.constant 1.000000e+00 : f32
    %372 = vector.broadcast %cst_80 : f32 to vector<4x32xf32>
    %373 = arith.addf %372, %371 : vector<4x32xf32>
    %374 = arith.divf %372, %373 : vector<4x32xf32>
    %375 = arith.mulf %366, %322 : vector<4x32xf32>
    %376 = arith.mulf %360, %368 : vector<4x32xf32>
    %377 = arith.addf %375, %376 : vector<4x32xf32>
    %378 = math.tanh %377 : vector<4x32xf32>
    %379 = arith.mulf %374, %378 : vector<4x32xf32>
    %c0_81 = arith.constant 0 : index
    %c80 = arith.constant 80 : index
    %380 = vector.load %arg3[%c0_81, %c80] : memref<4x128xf32, #tpu.memory_space<vmem>>, vector<4x16xf32>
    tpu.vector_store %arg3[%c0_81, %c80], %349 {strides = array<i32>} : memref<4x128xf32, #tpu.memory_space<vmem>>, vector<4x16xf32>,
    %c0_82 = arith.constant 0 : index
    %c160 = arith.constant 160 : index
    %381 = vector.load %arg4[%c0_82, %c160] : memref<4x256xf32, #tpu.memory_space<vmem>>, vector<4x32xf32>
    tpu.vector_store %arg4[%c0_82, %c160], %379 {strides = array<i32>} : memref<4x256xf32, #tpu.memory_space<vmem>>, vector<4x32xf32>,
    %382 = vector.broadcast %4 : vector<1x32xf32> to vector<4x32xf32>
    %383 = arith.mulf %379, %382 : vector<4x32xf32>
    %cst_83 = arith.constant dense<0.000000e+00> : vector<4xf32>
    %384 = vector.multi_reduction <add>, %383, %cst_83 [1] : vector<4x32xf32> to vector<4xf32>
    %385 = vector.shape_cast %384 : vector<4xf32> to vector<4x1xf32>
    %386 = vector.broadcast %5 : vector<1x32xf32> to vector<4x32xf32>
    %387 = arith.mulf %377, %386 : vector<4x32xf32>
    %cst_84 = arith.constant dense<0.000000e+00> : vector<4xf32>
    %388 = vector.multi_reduction <add>, %387, %cst_84 [1] : vector<4x32xf32> to vector<4xf32>
    %389 = vector.shape_cast %388 : vector<4xf32> to vector<4x1xf32>
    %390 = vector.broadcast %385 : vector<4x1xf32> to vector<4x16xf32>
    %391 = arith.addf %49, %390 : vector<4x16xf32>
    %392 = vector.broadcast %389 : vector<4x1xf32> to vector<4x16xf32>
    %393 = arith.addf %391, %392 : vector<4x16xf32>
    %cst_85 = arith.constant dense<0xFF800000> : vector<4xf32>
    %394 = vector.multi_reduction <maximumf>, %393, %cst_85 [1] : vector<4x16xf32> to vector<4xf32>
    %395 = vector.shape_cast %394 : vector<4xf32> to vector<4x1xf32>
    %396 = vector.broadcast %395 : vector<4x1xf32> to vector<4x16xf32>
    %397 = arith.subf %393, %396 : vector<4x16xf32>
    %398 = math.exp %397 : vector<4x16xf32>
    %cst_86 = arith.constant dense<0.000000e+00> : vector<4xf32>
    %399 = vector.multi_reduction <add>, %398, %cst_86 [1] : vector<4x16xf32> to vector<4xf32>
    %400 = vector.shape_cast %399 : vector<4xf32> to vector<4x1xf32>
    %401 = vector.broadcast %400 : vector<4x1xf32> to vector<4x16xf32>
    %402 = arith.divf %398, %401 : vector<4x16xf32>
    %403 = vector.extract_strided_slice %0 {offsets = [0, 96], sizes = [4, 16], strides = [1, 1]} : vector<4x128xf32> to vector<4x16xf32>
    %404 = arith.mulf %402, %403 : vector<4x16xf32>
    %cst_87 = arith.constant dense<0.000000e+00> : vector<4x128xf32>
    %405 = tpu.matmul %404, %1, %cst_87 {dimension_numbers = #tpu.dot_dimension_numbers<[1], [0], [0], [1], [0, 0, 1, 1], [], []>} : vector<4x16xf32>, vector<16x128xf32>, vector<4x128xf32> -> vector<4x128xf32>
    %cst_88 = arith.constant dense<0.000000e+00> : vector<4x128xf32>
    %406 = tpu.matmul %379, %2, %cst_88 {dimension_numbers = #tpu.dot_dimension_numbers<[1], [0], [0], [1], [0, 0, 1, 1], [], []>} : vector<4x32xf32>, vector<32x128xf32>, vector<4x128xf32> -> vector<4x128xf32>
    %407 = arith.addf %405, %406 : vector<4x128xf32>
    %408 = vector.broadcast %3 : vector<1x128xf32> to vector<4x128xf32>
    %409 = arith.addf %407, %408 : vector<4x128xf32>
    %410 = vector.extract_strided_slice %409 {offsets = [0, 0], sizes = [4, 32], strides = [1, 1]} : vector<4x128xf32> to vector<4x32xf32>
    %411 = arith.negf %410 : vector<4x32xf32>
    %412 = math.exp %411 : vector<4x32xf32>
    %cst_89 = arith.constant 1.000000e+00 : f32
    %413 = vector.broadcast %cst_89 : f32 to vector<4x32xf32>
    %414 = arith.addf %413, %412 : vector<4x32xf32>
    %415 = arith.divf %413, %414 : vector<4x32xf32>
    %416 = vector.extract_strided_slice %409 {offsets = [0, 32], sizes = [4, 32], strides = [1, 1]} : vector<4x128xf32> to vector<4x32xf32>
    %417 = arith.negf %416 : vector<4x32xf32>
    %418 = math.exp %417 : vector<4x32xf32>
    %cst_90 = arith.constant 1.000000e+00 : f32
    %419 = vector.broadcast %cst_90 : f32 to vector<4x32xf32>
    %420 = arith.addf %419, %418 : vector<4x32xf32>
    %421 = arith.divf %419, %420 : vector<4x32xf32>
    %422 = vector.extract_strided_slice %409 {offsets = [0, 64], sizes = [4, 32], strides = [1, 1]} : vector<4x128xf32> to vector<4x32xf32>
    %423 = math.tanh %422 : vector<4x32xf32>
    %424 = vector.extract_strided_slice %409 {offsets = [0, 96], sizes = [4, 32], strides = [1, 1]} : vector<4x128xf32> to vector<4x32xf32>
    %425 = arith.negf %424 : vector<4x32xf32>
    %426 = math.exp %425 : vector<4x32xf32>
    %cst_91 = arith.constant 1.000000e+00 : f32
    %427 = vector.broadcast %cst_91 : f32 to vector<4x32xf32>
    %428 = arith.addf %427, %426 : vector<4x32xf32>
    %429 = arith.divf %427, %428 : vector<4x32xf32>
    %430 = arith.mulf %421, %377 : vector<4x32xf32>
    %431 = arith.mulf %415, %423 : vector<4x32xf32>
    %432 = arith.addf %430, %431 : vector<4x32xf32>
    %433 = math.tanh %432 : vector<4x32xf32>
    %434 = arith.mulf %429, %433 : vector<4x32xf32>
    %c0_92 = arith.constant 0 : index
    %c96_93 = arith.constant 96 : index
    %435 = vector.load %arg3[%c0_92, %c96_93] : memref<4x128xf32, #tpu.memory_space<vmem>>, vector<4x16xf32>
    tpu.vector_store %arg3[%c0_92, %c96_93], %404 {strides = array<i32>} : memref<4x128xf32, #tpu.memory_space<vmem>>, vector<4x16xf32>,
    %c0_94 = arith.constant 0 : index
    %c192 = arith.constant 192 : index
    %436 = vector.load %arg4[%c0_94, %c192] : memref<4x256xf32, #tpu.memory_space<vmem>>, vector<4x32xf32>
    tpu.vector_store %arg4[%c0_94, %c192], %434 {strides = array<i32>} : memref<4x256xf32, #tpu.memory_space<vmem>>, vector<4x32xf32>,
    %437 = vector.broadcast %4 : vector<1x32xf32> to vector<4x32xf32>
    %438 = arith.mulf %434, %437 : vector<4x32xf32>
    %cst_95 = arith.constant dense<0.000000e+00> : vector<4xf32>
    %439 = vector.multi_reduction <add>, %438, %cst_95 [1] : vector<4x32xf32> to vector<4xf32>
    %440 = vector.shape_cast %439 : vector<4xf32> to vector<4x1xf32>
    %441 = vector.broadcast %5 : vector<1x32xf32> to vector<4x32xf32>
    %442 = arith.mulf %432, %441 : vector<4x32xf32>
    %cst_96 = arith.constant dense<0.000000e+00> : vector<4xf32>
    %443 = vector.multi_reduction <add>, %442, %cst_96 [1] : vector<4x32xf32> to vector<4xf32>
    %444 = vector.shape_cast %443 : vector<4xf32> to vector<4x1xf32>
    %445 = vector.broadcast %440 : vector<4x1xf32> to vector<4x16xf32>
    %446 = arith.addf %49, %445 : vector<4x16xf32>
    %447 = vector.broadcast %444 : vector<4x1xf32> to vector<4x16xf32>
    %448 = arith.addf %446, %447 : vector<4x16xf32>
    %cst_97 = arith.constant dense<0xFF800000> : vector<4xf32>
    %449 = vector.multi_reduction <maximumf>, %448, %cst_97 [1] : vector<4x16xf32> to vector<4xf32>
    %450 = vector.shape_cast %449 : vector<4xf32> to vector<4x1xf32>
    %451 = vector.broadcast %450 : vector<4x1xf32> to vector<4x16xf32>
    %452 = arith.subf %448, %451 : vector<4x16xf32>
    %453 = math.exp %452 : vector<4x16xf32>
    %cst_98 = arith.constant dense<0.000000e+00> : vector<4xf32>
    %454 = vector.multi_reduction <add>, %453, %cst_98 [1] : vector<4x16xf32> to vector<4xf32>
    %455 = vector.shape_cast %454 : vector<4xf32> to vector<4x1xf32>
    %456 = vector.broadcast %455 : vector<4x1xf32> to vector<4x16xf32>
    %457 = arith.divf %453, %456 : vector<4x16xf32>
    %458 = vector.extract_strided_slice %0 {offsets = [0, 112], sizes = [4, 16], strides = [1, 1]} : vector<4x128xf32> to vector<4x16xf32>
    %459 = arith.mulf %457, %458 : vector<4x16xf32>
    %cst_99 = arith.constant dense<0.000000e+00> : vector<4x128xf32>
    %460 = tpu.matmul %459, %1, %cst_99 {dimension_numbers = #tpu.dot_dimension_numbers<[1], [0], [0], [1], [0, 0, 1, 1], [], []>} : vector<4x16xf32>, vector<16x128xf32>, vector<4x128xf32> -> vector<4x128xf32>
    %cst_100 = arith.constant dense<0.000000e+00> : vector<4x128xf32>
    %461 = tpu.matmul %434, %2, %cst_100 {dimension_numbers = #tpu.dot_dimension_numbers<[1], [0], [0], [1], [0, 0, 1, 1], [], []>} : vector<4x32xf32>, vector<32x128xf32>, vector<4x128xf32> -> vector<4x128xf32>
    %462 = arith.addf %460, %461 : vector<4x128xf32>
    %463 = vector.broadcast %3 : vector<1x128xf32> to vector<4x128xf32>
    %464 = arith.addf %462, %463 : vector<4x128xf32>
    %465 = vector.extract_strided_slice %464 {offsets = [0, 0], sizes = [4, 32], strides = [1, 1]} : vector<4x128xf32> to vector<4x32xf32>
    %466 = arith.negf %465 : vector<4x32xf32>
    %467 = math.exp %466 : vector<4x32xf32>
    %cst_101 = arith.constant 1.000000e+00 : f32
    %468 = vector.broadcast %cst_101 : f32 to vector<4x32xf32>
    %469 = arith.addf %468, %467 : vector<4x32xf32>
    %470 = arith.divf %468, %469 : vector<4x32xf32>
    %471 = vector.extract_strided_slice %464 {offsets = [0, 32], sizes = [4, 32], strides = [1, 1]} : vector<4x128xf32> to vector<4x32xf32>
    %472 = arith.negf %471 : vector<4x32xf32>
    %473 = math.exp %472 : vector<4x32xf32>
    %cst_102 = arith.constant 1.000000e+00 : f32
    %474 = vector.broadcast %cst_102 : f32 to vector<4x32xf32>
    %475 = arith.addf %474, %473 : vector<4x32xf32>
    %476 = arith.divf %474, %475 : vector<4x32xf32>
    %477 = vector.extract_strided_slice %464 {offsets = [0, 64], sizes = [4, 32], strides = [1, 1]} : vector<4x128xf32> to vector<4x32xf32>
    %478 = math.tanh %477 : vector<4x32xf32>
    %479 = vector.extract_strided_slice %464 {offsets = [0, 96], sizes = [4, 32], strides = [1, 1]} : vector<4x128xf32> to vector<4x32xf32>
    %480 = arith.negf %479 : vector<4x32xf32>
    %481 = math.exp %480 : vector<4x32xf32>
    %cst_103 = arith.constant 1.000000e+00 : f32
    %482 = vector.broadcast %cst_103 : f32 to vector<4x32xf32>
    %483 = arith.addf %482, %481 : vector<4x32xf32>
    %484 = arith.divf %482, %483 : vector<4x32xf32>
    %485 = arith.mulf %476, %432 : vector<4x32xf32>
    %486 = arith.mulf %470, %478 : vector<4x32xf32>
    %487 = arith.addf %485, %486 : vector<4x32xf32>
    %488 = math.tanh %487 : vector<4x32xf32>
    %489 = arith.mulf %484, %488 : vector<4x32xf32>
    %c0_104 = arith.constant 0 : index
    %c112 = arith.constant 112 : index
    %490 = vector.load %arg3[%c0_104, %c112] : memref<4x128xf32, #tpu.memory_space<vmem>>, vector<4x16xf32>
    tpu.vector_store %arg3[%c0_104, %c112], %459 {strides = array<i32>} : memref<4x128xf32, #tpu.memory_space<vmem>>, vector<4x16xf32>,
    %c0_105 = arith.constant 0 : index
    %c224 = arith.constant 224 : index
    %491 = vector.load %arg4[%c0_105, %c224] : memref<4x256xf32, #tpu.memory_space<vmem>>, vector<4x32xf32>
    tpu.vector_store %arg4[%c0_105, %c224], %489 {strides = array<i32>} : memref<4x256xf32, #tpu.memory_space<vmem>>, vector<4x32xf32>,
    return
  }
}

</mosaic_0001>

<llo_original>
// kernel: encoder_forward.1
$region0: #{encoder_forward.1}
  #allocation0 [shape = 'u32[]', space=smem, size = 0x4, offset = 0x4, fixed_abs, tag = 'smem constant byte address 0x4 - core index']
  #allocation1 [shape = 'u32[144,128]{1,0:T(1,128)}', space=vmem, size = 0x12000, scoped, tag = 'internal scratch']
  %s0 = inlined_call_operand.vmem [shape: f32[4,128], index: 0, kind: input, shape index: {}]
  %s1 = inlined_call_operand.hbm [shape: f32[50,128], index: 1, kind: input, shape index: {}]
  %s2 = inlined_call_operand.vmem [shape: f32[9], index: 2, kind: input, shape index: {}]
  %s3 = inlined_call_operand.vmem [shape: f32[4,128], index: 3, kind: output, shape index: {0}]
  %s4 = inlined_call_operand.vmem [shape: f32[4,256], index: 4, kind: output, shape index: {1}]
  %5 = xla_tuple %s3, %s4
  %s6 = sld [smem:[#allocation0]]
  $region38: #{encoder_forward.1} parent=0
    _
  %s8 = ssub.s32 1, %s6
  %s9 = scalar_select 0, %s8, %s6
  $region1: #{encoder_forward.1} parent=0
    #allocation2 [shape = 'u8[28672]{0}', space=vmem, size = 0x7000, scoped, tag = 'input window, operand 1, single buffered']
    #allocation3 [shape = 's32[1]{0}', space=sflag, size = 0x4, scoped, tag = 'scoped memory for encoder_forward.1']
    #allocation4 [shape = 's32[1]{0}', space=sflag, size = 0x4, scoped, tag = 'scoped memory for encoder_forward.1']
    #allocation5 [shape = 'u8[512]{0}', space=smem, size = 0x200, scoped, tag = 'input window, operand 2, single buffered']
    %10 = vsyncpa [#allocation3], 0
    %11 = vsyncpa [#allocation4], 0
    // Predicated region
    $region2: #{encoder_forward.1} parent=1 // pred_check
      _
    $region3: #{encoder_forward.1} parent=1 // pred_check_branch
      %13 = sbr.rel (0) target = $region5
    $region4: #{encoder_forward.1} parent=1 // pred_region
      _
    $region5: #{encoder_forward.1} parent=1 // pred_fallthru
      _
    // Predicated region
    $region6: #{encoder_forward.1} parent=1 // pred_check
      _
    $region7: #{encoder_forward.1} parent=1 // pred_check_branch
      %15 = sbr.rel (0) target = $region9
    $region8: #{encoder_forward.1} parent=1 // pred_region
      %s17 = ssub.s32 896, 896
      %18 = vsyncadd [#allocation3], %s17
      %s19 = sshll.u32 [#allocation2], 4
      %s20 = int_to_ptr.vmem [resolvable:$true] %s19
      %25 = dma.hbm_to_vmem [thread:$0]  %s1, 896, %s20, [#allocation3], 128, 128, 8
    $region9: #{encoder_forward.1} parent=1 // pred_fallthru
      _
    // Predicated region
    $region10: #{encoder_forward.1} parent=1 // pred_check
      _
    $region11: #{encoder_forward.1} parent=1 // pred_check_branch
      %27 = sbr.rel (0) target = $region13
    $region12: #{encoder_forward.1} parent=1 // pred_region
      %s29 = ssub.s32 16, 16
      %30 = vsyncadd [#allocation4], %s29
      %s32 = sshll.u32 %s2, 4
      %s33 = int_to_ptr.vmem [resolvable:$true] %s32
      %35 = dma.vmem_to_smem %s33, 16, [#allocation5], [#allocation4]
    $region13: #{encoder_forward.1} parent=1 // pred_fallthru
      _
    // Predicated region
    $region14: #{encoder_forward.1} parent=1 // pred_check
      _
    $region15: #{encoder_forward.1} parent=1 // pred_check_branch
      %37 = sbr.rel (0) target = $region17
    $region16: #{encoder_forward.1} parent=1 // pred_region
      %38 = dma.done [#allocation3], 896
    $region17: #{encoder_forward.1} parent=1 // pred_fallthru
      _
    // Predicated region
    $region18: #{encoder_forward.1} parent=1 // pred_check
      _
    $region19: #{encoder_forward.1} parent=1 // pred_check_branch
      %40 = sbr.rel (0) target = $region21
    $region20: #{encoder_forward.1} parent=1 // pred_region
      %41 = dma.done [#allocation4], 16
    $region21: #{encoder_forward.1} parent=1 // pred_fallthru
      _
    %42 = sfence
    %v43 = vld [vmem:[%s0] sm:$0xf]
    %v44 = vld [vmem:[#allocation2] sm:$0xff]
    %v45 = vld [vmem:[#allocation2 + $0x8] sm:$0xff]
    %v46 = vld [vmem:[#allocation2 + $0x10] sm:$0xff]
    %v47 = vld [vmem:[#allocation2 + $0x18] sm:$0xff]
    %v48 = vld [vmem:[#allocation2 + $0x20] sm:$0xff]
    %v49 = vld [vmem:[#allocation2 + $0x28] sm:$0xff]
    %v50 = vld [vmem:[#allocation2 + $0x30] sm:$0x1]
    %v51 = vld [vmem:[#allocation2 + $0x31] sm:$0x1]
    %s52 = sld [smem:[#allocation5 + $0x8]]
    %v53 = vstv %s52
    %v54 = vadd.f32 %v53, 0.0
    %s55 = sld [smem:[#allocation5]]
    %v56 = vstv %s55
    %v57 = vmul.f32 %v56, %v43
    %v58 = vadd.f32 %v54, %v57
    %s59 = sld [smem:[#allocation5 + $0x1]]
    %v60 = vstv %s59
    %v61 = vmul.f32 %v60, %v43
    %63 = vrot.lane.b32.xlu0 %v61, 112
    %v64 = vpop.permute.xlu0 %63
    %v66 = vadd.f32 %v58, %v64
    %s67 = sld [smem:[#allocation5 + $0x2]]
    %v68 = vstv %s67
    %v69 = vmul.f32 %v68, %v43
    %71 = vrot.lane.b32.xlu0 %v69, 96
    %v72 = vpop.permute.xlu0 %71
    %v74 = vadd.f32 %v66, %v72
    %s75 = sld [smem:[#allocation5 + $0x3]]
    %v76 = vstv %s75
    %v77 = vmul.f32 %v76, %v43
    %79 = vrot.lane.b32.xlu0 %v77, 80
    %v80 = vpop.permute.xlu0 %79
    %v82 = vadd.f32 %v74, %v80
    %s83 = sld [smem:[#allocation5 + $0x4]]
    %v84 = vstv %s83
    %v85 = vmul.f32 %v84, %v43
    %87 = vrot.lane.b32.xlu0 %v85, 64
    %v88 = vpop.permute.xlu0 %87
    %v90 = vadd.f32 %v82, %v88
    %s91 = sld [smem:[#allocation5 + $0x5]]
    %v92 = vstv %s91
    %v93 = vmul.f32 %v92, %v43
    %95 = vrot.lane.b32.xlu0 %v93, 48
    %v96 = vpop.permute.xlu0 %95
    %v98 = vadd.f32 %v90, %v96
    %s99 = sld [smem:[#allocation5 + $0x6]]
    %v100 = vstv %s99
    %v101 = vmul.f32 %v100, %v43
    %103 = vrot.lane.b32.xlu0 %v101, 32
    %v104 = vpop.permute.xlu0 %103
    %v106 = vadd.f32 %v98, %v104
    %s107 = sld [smem:[#allocation5 + $0x7]]
    %v108 = vstv %s107
    %v109 = vmul.f32 %v108, %v43
    %111 = vrot.lane.b32.xlu0 %v109, 16
    %v112 = vpop.permute.xlu0 %111
    %v114 = vadd.f32 %v106, %v112
    %v115 = vlaneseq
    %v116 = vshrl.u32 %v115, 7
    %v117 = vsub.s32 0, %v116
    %v118 = vrot.slane %v51, %v117
    %v119 = vmul.f32 %v118, 0.0
    %vm120 = vcmask 261120
    %v121 = vsel %vm120, %v119, 0.0
    %122 = vadd.xlane.f32.xlu0 %v121
    %v123 = vpop.xlane.xlu0 %122
    %125 = vrot.lane.b32.xlu0 %v119, 96
    %v126 = vpop.permute.xlu0 %125
    %v128 = vsel %vm120, %v126, 0.0
    %129 = vadd.xlane.f32.xlu0 %v128
    %v130 = vpop.xlane.xlu0 %129
    %v131 = vadd.f32 %v114, %v123
    %v132 = vadd.f32 %v131, %v130
    %vm133 = vcmask 125952
    %v134 = vsel %vm133, %v132, -inf
    %135 = vmax.xlane.f32.xlu0 %v134
    %v136 = vpop.xlane.xlu0 %135
    %v137 = vsub.f32 %v132, %v136
    %v138 = vmul.f32 %v137, 1.442695
    %v139 = vpow.pop %v138
    %v140 = vsel %vm133, %v139, 0.0
    %141 = vadd.xlane.f32.xlu0 %v140
    %v142 = vpop.xlane.xlu0 %141
    %v143 = vrcp.pop %v142
    %v144 = vmul.f32 %v139, %v143
    %v145 = vmul.f32 %v144, %v43
    %v147 = vsel %vm120, 0.0, 0
    %149 = vmatprep.subr.mxu0 0.0
    %150 = vmatpush1.msra.mxu0 %v46
    %151 = vmatprep.subr.mxu0 0.0
    %152 = vmatpush1.msra.mxu0 %v47
    %153 = vmatprep.subr.mxu0 0.0
    %154 = vmatpush1.msra.mxu0 %v48
    %155 = vmatprep.subr.mxu0 0.0
    %156 = vmatpush1.msra.mxu0 %v49
    %157 = vmatprep.subr.mxu0 0.0
    %158 = vmatpush1.msra.mxu0 0.0
    %159 = vmatprep.subr.mxu0 0.0
    %160 = vmatpush1.msra.mxu0 0.0
    %161 = vmatprep.subr.mxu0 0.0
    %162 = vmatpush1.msra.mxu0 0.0
    %163 = vmatprep.subr.mxu0 0.0
    %164 = vmatpush1.msra.mxu0 0.0
    %165 = vmatprep.subr.mxu0 0.0
    %166 = vmatpush1.msra.mxu0 0.0
    %167 = vmatprep.subr.mxu0 0.0
    %168 = vmatpush1.msra.mxu0 0.0
    %169 = vmatprep.subr.mxu0 0.0
    %170 = vmatpush1.msra.mxu0 0.0
    %171 = vmatprep.subr.mxu0 0.0
    %172 = vmatpush1.msra.mxu0 0.0
    %173 = vmatprep.subr.mxu0 0.0
    %174 = vmatpush1.msra.mxu0 0.0
    %175 = vmatprep.subr.mxu0 0.0
    %176 = vmatpush1.msra.mxu0 0.0
    %177 = vmatprep.subr.mxu0 0.0
    %178 = vmatpush1.msra.mxu0 0.0
    %179 = vmatprep.subr.mxu0 0.0
    %180 = vmatpush1.msra.mxu0 0.0
    %181 = vmatprep.subr.mxu0 0.0
    %182 = vmatpush1.msra.mxu0 0.0
    %183 = vmatprep.subr.mxu0 0.0
    %184 = vmatpush1.msra.mxu0 0.0
    %185 = vmatprep.subr.mxu0 0.0
    %186 = vmatpush1.msra.mxu0 0.0
    %187 = vmatprep.subr.mxu0 0.0
    %188 = vmatpush1.msra.mxu0 0.0
    %189 = vmatprep.subr.mxu0 0.0
    %190 = vmatpush1.msra.mxu0 0.0
    %191 = vmatprep.subr.mxu0 0.0
    %192 = vmatpush1.msra.mxu0 0.0
    %193 = vmatprep.subr.mxu0 0.0
    %194 = vmatpush1.msra.mxu0 0.0
    %195 = vmatprep.subr.mxu0 0.0
    %196 = vmatpush1.msra.mxu0 0.0
    %197 = vmatprep.subr.mxu0 0.0
    %198 = vmatpush1.msra.mxu0 0.0
    %199 = vmatprep.subr.mxu0 0.0
    %200 = vmatpush1.msra.mxu0 0.0
    %201 = vmatprep.subr.mxu0 0.0
    %202 = vmatpush1.msra.mxu0 0.0
    %203 = vmatprep.subr.mxu0 0.0
    %204 = vmatpush1.msra.mxu0 0.0
    %205 = vmatprep.subr.mxu0 0.0
    %206 = vmatpush1.msra.mxu0 0.0
    %207 = vmatprep.subr.mxu0 0.0
    %208 = vmatpush1.msra.mxu0 0.0
    %209 = vmatprep.subr.mxu0 0.0
    %210 = vmatpush1.msra.mxu0 0.0
    %211 = vmatprep.subr.mxu0 0.0
    %212 = vmatpush1.msra.mxu0 0.0
    %213 = vmatprep.mubr.f32.mxu0 0.0
    %214 = vmatmul.mubr.f32.gmra.mrb[0].mxu0 %v147
    %v215 = vpop.f32.mrb[0].mxu0
    %v216 = vadd.f32 0.0, %v215
    %v217 = vpop.f32.mrb[0].mxu0
    %218 = vdwg.mxu0
    %vm219 = vcmask 130048
    %v221 = vsel %vm219, %v145, 0
    %223 = vmatprep.subr.mxu0 0.0
    %224 = vmatpush1.msra.mxu0 %v44
    %225 = vmatprep.subr.mxu0 0.0
    %226 = vmatpush1.msra.mxu0 %v45
    %227 = vmatprep.subr.mxu0 0.0
    %228 = vmatpush1.msra.mxu0 0.0
    %229 = vmatprep.subr.mxu0 0.0
    %230 = vmatpush1.msra.mxu0 0.0
    %231 = vmatprep.subr.mxu0 0.0
    %232 = vmatpush1.msra.mxu0 0.0
    %233 = vmatprep.subr.mxu0 0.0
    %234 = vmatpush1.msra.mxu0 0.0
    %235 = vmatprep.subr.mxu0 0.0
    %236 = vmatpush1.msra.mxu0 0.0
    %237 = vmatprep.subr.mxu0 0.0
    %238 = vmatpush1.msra.mxu0 0.0
    %239 = vmatprep.subr.mxu0 0.0
    %240 = vmatpush1.msra.mxu0 0.0
    %241 = vmatprep.subr.mxu0 0.0
    %242 = vmatpush1.msra.mxu0 0.0
    %243 = vmatprep.subr.mxu0 0.0
    %244 = vmatpush1.msra.mxu0 0.0
    %245 = vmatprep.subr.mxu0 0.0
    %246 = vmatpush1.msra.mxu0 0.0
    %247 = vmatprep.subr.mxu0 0.0
    %248 = vmatpush1.msra.mxu0 0.0
    %249 = vmatprep.subr.mxu0 0.0
    %250 = vmatpush1.msra.mxu0 0.0
    %251 = vmatprep.subr.mxu0 0.0
    %252 = vmatpush1.msra.mxu0 0.0
    %253 = vmatprep.subr.mxu0 0.0
    %254 = vmatpush1.msra.mxu0 0.0
    %255 = vmatprep.subr.mxu0 0.0
    %256 = vmatpush1.msra.mxu0 0.0
    %257 = vmatprep.subr.mxu0 0.0
    %258 = vmatpush1.msra.mxu0 0.0
    %259 = vmatprep.subr.mxu0 0.0
    %260 = vmatpush1.msra.mxu0 0.0
    %261 = vmatprep.subr.mxu0 0.0
    %262 = vmatpush1.msra.mxu0 0.0
    %263 = vmatprep.subr.mxu0 0.0
    %264 = vmatpush1.msra.mxu0 0.0
    %265 = vmatprep.subr.mxu0 0.0
    %266 = vmatpush1.msra.mxu0 0.0
    %267 = vmatprep.subr.mxu0 0.0
    %268 = vmatpush1.msra.mxu0 0.0
    %269 = vmatprep.subr.mxu0 0.0
    %270 = vmatpush1.msra.mxu0 0.0
    %271 = vmatprep.subr.mxu0 0.0
    %272 = vmatpush1.msra.mxu0 0.0
    %273 = vmatprep.subr.mxu0 0.0
    %274 = vmatpush1.msra.mxu0 0.0
    %275 = vmatprep.subr.mxu0 0.0
    %276 = vmatpush1.msra.mxu0 0.0
    %277 = vmatprep.subr.mxu0 0.0
    %278 = vmatpush1.msra.mxu0 0.0
    %279 = vmatprep.subr.mxu0 0.0
    %280 = vmatpush1.msra.mxu0 0.0
    %281 = vmatprep.subr.mxu0 0.0
    %282 = vmatpush1.msra.mxu0 0.0
    %283 = vmatprep.subr.mxu0 0.0
    %284 = vmatpush1.msra.mxu0 0.0
    %285 = vmatprep.subr.mxu0 0.0
    %286 = vmatpush1.msra.mxu0 0.0
    %287 = vmatprep.mubr.f32.mxu0 0.0
    %288 = vmatmul.mubr.f32.gmra.mrb[0].mxu0 %v221
    %v289 = vpop.f32.mrb[0].mxu0
    %v290 = vadd.f32 %v216, %v289
    %v291 = vpop.f32.mrb[0].mxu0
    %292 = vdwg.mxu0
    %v293 = vlaneseq
    %v294 = vshrl.u32 %v293, 7
    %v295 = vsub.s32 0, %v294
    %v296 = vrot.slane %v50, %v295
    %v297 = vadd.f32 %v290, %v296
    %v298 = vxor.u32 %v297, 2147483648
    %v299 = vmul.f32 %v298, 1.442695
    %v300 = vpow.pop %v299
    %v301 = vadd.f32 %v300, 1.0
    %v302 = vrcp.pop %v301
    %v303 = vmul.f32 1.0, %v302
    %v304 = vtanh.pop %v297
    %v305 = vmul.f32 %v303, 0.0
    %307 = vrot.lane.b32.xlu0 %v304, 64
    %v308 = vpop.permute.xlu0 %307
    %v310 = vmul.f32 %v303, %v308
    %312 = vrot.lane.b32.xlu0 %v310, 32
    %v313 = vpop.permute.xlu0 %312
    %v315 = vadd.f32 %v305, %v313
    %v316 = vtanh.pop %v315
    %318 = vrot.lane.b32.xlu0 %v316, 64
    %v319 = vpop.permute.xlu0 %318
    %v321 = vmul.f32 %v303, %v319
    %322 = vst.msk [vmem:[%s3] sm:$0xf] %vm133, %v145
    %324 = vrot.lane.b32.xlu0 %v321, 32
    %v325 = vpop.permute.xlu0 %324
    %vm327 = vcmask 257024
    %328 = vst.msk [vmem:[%s4] sm:$0xf] %vm327, %v325
    %330 = vrot.lane.b32.xlu0 %v118, 96
    %v331 = vpop.permute.xlu0 %330
    %v333 = vmul.f32 %v321, %v331
    %335 = vrot.lane.b32.xlu0 %v333, 32
    %v336 = vpop.permute.xlu0 %335
    %v338 = vsel %vm327, %v336, 0.0
    %339 = vadd.xlane.f32.xlu0 %v338
    %v340 = vpop.xlane.xlu0 %339
    %v341 = vmul.f32 %v315, %v118
    %343 = vrot.lane.b32.xlu0 %v341, 96
    %v344 = vpop.permute.xlu0 %343
    %v346 = vsel %vm327, %v344, 0.0
    %347 = vadd.xlane.f32.xlu0 %v346
    %v348 = vpop.xlane.xlu0 %347
    %v349 = vadd.f32 %v114, %v340
    %v350 = vadd.f32 %v349, %v348
    %v351 = vsel %vm133, %v350, -inf
    %352 = vmax.xlane.f32.xlu0 %v351
    %v353 = vpop.xlane.xlu0 %352
    %v354 = vsub.f32 %v350, %v353
    %v355 = vmul.f32 %v354, 1.442695
    %v356 = vpow.pop %v355
    %v357 = vsel %vm133, %v356, 0.0
    %358 = vadd.xlane.f32.xlu0 %v357
    %v359 = vpop.xlane.xlu0 %358
    %v360 = vrcp.pop %v359
    %v361 = vmul.f32 %v356, %v360
    %363 = vrot.lane.b32.xlu0 %v43, 112
    %v364 = vpop.permute.xlu0 %363
    %v366 = vmul.f32 %v361, %v364
    %v367 = vsel %vm120, %v325, 0
    %369 = vmatprep.subr.mxu0 0.0
    %370 = vmatpush1.msra.mxu0 %v46
    %371 = vmatprep.subr.mxu0 0.0
    %372 = vmatpush1.msra.mxu0 %v47
    %373 = vmatprep.subr.mxu0 0.0
    %374 = vmatpush1.msra.mxu0 %v48
    %375 = vmatprep.subr.mxu0 0.0
    %376 = vmatpush1.msra.mxu0 %v49
    %377 = vmatprep.subr.mxu0 0.0
    %378 = vmatpush1.msra.mxu0 0.0
    %379 = vmatprep.subr.mxu0 0.0
    %380 = vmatpush1.msra.mxu0 0.0
    %381 = vmatprep.subr.mxu0 0.0
    %382 = vmatpush1.msra.mxu0 0.0
    %383 = vmatprep.subr.mxu0 0.0
    %384 = vmatpush1.msra.mxu0 0.0
    %385 = vmatprep.subr.mxu0 0.0
    %386 = vmatpush1.msra.mxu0 0.0
    %387 = vmatprep.subr.mxu0 0.0
    %388 = vmatpush1.msra.mxu0 0.0
    %389 = vmatprep.subr.mxu0 0.0
    %390 = vmatpush1.msra.mxu0 0.0
    %391 = vmatprep.subr.mxu0 0.0
    %392 = vmatpush1.msra.mxu0 0.0
    %393 = vmatprep.subr.mxu0 0.0
    %394 = vmatpush1.msra.mxu0 0.0
    %395 = vmatprep.subr.mxu0 0.0
    %396 = vmatpush1.msra.mxu0 0.0
    %397 = vmatprep.subr.mxu0 0.0
    %398 = vmatpush1.msra.mxu0 0.0
    %399 = vmatprep.subr.mxu0 0.0
    %400 = vmatpush1.msra.mxu0 0.0
    %401 = vmatprep.subr.mxu0 0.0
    %402 = vmatpush1.msra.mxu0 0.0
    %403 = vmatprep.subr.mxu0 0.0
    %404 = vmatpush1.msra.mxu0 0.0
    %405 = vmatprep.subr.mxu0 0.0
    %406 = vmatpush1.msra.mxu0 0.0
    %407 = vmatprep.subr.mxu0 0.0
    %408 = vmatpush1.msra.mxu0 0.0
    %409 = vmatprep.subr.mxu0 0.0
    %410 = vmatpush1.msra.mxu0 0.0
    %411 = vmatprep.subr.mxu0 0.0
    %412 = vmatpush1.msra.mxu0 0.0
    %413 = vmatprep.subr.mxu0 0.0
    %414 = vmatpush1.msra.mxu0 0.0
    %415 = vmatprep.subr.mxu0 0.0
    %416 = vmatpush1.msra.mxu0 0.0
    %417 = vmatprep.subr.mxu0 0.0
    %418 = vmatpush1.msra.mxu0 0.0
    %419 = vmatprep.subr.mxu0 0.0
    %420 = vmatpush1.msra.mxu0 0.0
    %421 = vmatprep.subr.mxu0 0.0
    %422 = vmatpush1.msra.mxu0 0.0
    %423 = vmatprep.subr.mxu0 0.0
    %424 = vmatpush1.msra.mxu0 0.0
    %425 = vmatprep.subr.mxu0 0.0
    %426 = vmatpush1.msra.mxu0 0.0
    %427 = vmatprep.subr.mxu0 0.0
    %428 = vmatpush1.msra.mxu0 0.0
    %429 = vmatprep.subr.mxu0 0.0
    %430 = vmatpush1.msra.mxu0 0.0
    %431 = vmatprep.subr.mxu0 0.0
    %432 = vmatpush1.msra.mxu0 0.0
    %433 = vmatprep.mubr.f32.mxu0 0.0
    %434 = vmatmul.mubr.f32.gmra.mrb[0].mxu0 %v367
    %v435 = vpop.f32.mrb[0].mxu0
    %v436 = vadd.f32 0.0, %v435
    %v437 = vpop.f32.mrb[0].mxu0
    %438 = vdwg.mxu0
    %v440 = vsel %vm219, %v366, 0
    %442 = vmatprep.subr.mxu0 0.0
    %443 = vmatpush1.msra.mxu0 %v44
    %444 = vmatprep.subr.mxu0 0.0
    %445 = vmatpush1.msra.mxu0 %v45
    %446 = vmatprep.subr.mxu0 0.0
    %447 = vmatpush1.msra.mxu0 0.0
    %448 = vmatprep.subr.mxu0 0.0
    %449 = vmatpush1.msra.mxu0 0.0
    %450 = vmatprep.subr.mxu0 0.0
    %451 = vmatpush1.msra.mxu0 0.0
    %452 = vmatprep.subr.mxu0 0.0
    %453 = vmatpush1.msra.mxu0 0.0
    %454 = vmatprep.subr.mxu0 0.0
    %455 = vmatpush1.msra.mxu0 0.0
    %456 = vmatprep.subr.mxu0 0.0
    %457 = vmatpush1.msra.mxu0 0.0
    %458 = vmatprep.subr.mxu0 0.0
    %459 = vmatpush1.msra.mxu0 0.0
    %460 = vmatprep.subr.mxu0 0.0
    %461 = vmatpush1.msra.mxu0 0.0
    %462 = vmatprep.subr.mxu0 0.0
    %463 = vmatpush1.msra.mxu0 0.0
    %464 = vmatprep.subr.mxu0 0.0
    %465 = vmatpush1.msra.mxu0 0.0
    %466 = vmatprep.subr.mxu0 0.0
    %467 = vmatpush1.msra.mxu0 0.0
    %468 = vmatprep.subr.mxu0 0.0
    %469 = vmatpush1.msra.mxu0 0.0
    %470 = vmatprep.subr.mxu0 0.0
    %471 = vmatpush1.msra.mxu0 0.0
    %472 = vmatprep.subr.mxu0 0.0
    %473 = vmatpush1.msra.mxu0 0.0
    %474 = vmatprep.subr.mxu0 0.0
    %475 = vmatpush1.msra.mxu0 0.0
    %476 = vmatprep.subr.mxu0 0.0
    %477 = vmatpush1.msra.mxu0 0.0
    %478 = vmatprep.subr.mxu0 0.0
    %479 = vmatpush1.msra.mxu0 0.0
    %480 = vmatprep.subr.mxu0 0.0
    %481 = vmatpush1.msra.mxu0 0.0
    %482 = vmatprep.subr.mxu0 0.0
    %483 = vmatpush1.msra.mxu0 0.0
    %484 = vmatprep.subr.mxu0 0.0
    %485 = vmatpush1.msra.mxu0 0.0
    %486 = vmatprep.subr.mxu0 0.0
    %487 = vmatpush1.msra.mxu0 0.0
    %488 = vmatprep.subr.mxu0 0.0
    %489 = vmatpush1.msra.mxu0 0.0
    %490 = vmatprep.subr.mxu0 0.0
    %491 = vmatpush1.msra.mxu0 0.0
    %492 = vmatprep.subr.mxu0 0.0
    %493 = vmatpush1.msra.mxu0 0.0
    %494 = vmatprep.subr.mxu0 0.0
    %495 = vmatpush1.msra.mxu0 0.0
    %496 = vmatprep.subr.mxu0 0.0
    %497 = vmatpush1.msra.mxu0 0.0
    %498 = vmatprep.subr.mxu0 0.0
    %499 = vmatpush1.msra.mxu0 0.0
    %500 = vmatprep.subr.mxu0 0.0
    %501 = vmatpush1.msra.mxu0 0.0
    %502 = vmatprep.subr.mxu0 0.0
    %503 = vmatpush1.msra.mxu0 0.0
    %504 = vmatprep.subr.mxu0 0.0
    %505 = vmatpush1.msra.mxu0 0.0
    %506 = vmatprep.mubr.f32.mxu0 0.0
    %507 = vmatmul.mubr.f32.gmra.mrb[0].mxu0 %v440
    %v508 = vpop.f32.mrb[0].mxu0
    %v509 = vadd.f32 %v436, %v508
    %v510 = vpop.f32.mrb[0].mxu0
    %511 = vdwg.mxu0
    %v512 = vadd.f32 %v509, %v296
    %v513 = vxor.u32 %v512, 2147483648
    %v514 = vmul.f32 %v513, 1.442695
    %v515 = vpow.pop %v514
    %v516 = vadd.f32 %v515, 1.0
    %v517 = vrcp.pop %v516
    %v518 = vmul.f32 1.0, %v517
    %v519 = vtanh.pop %v512
    %v520 = vmul.f32 %v518, %v315
    %522 = vrot.lane.b32.xlu0 %v519, 64
    %v523 = vpop.permute.xlu0 %522
    %v525 = vmul.f32 %v518, %v523
    %527 = vrot.lane.b32.xlu0 %v525, 32
    %v528 = vpop.permute.xlu0 %527
    %v530 = vadd.f32 %v520, %v528
    %v531 = vtanh.pop %v530
    %533 = vrot.lane.b32.xlu0 %v531, 64
    %v534 = vpop.permute.xlu0 %533
    %v536 = vmul.f32 %v518, %v534
    %537 = vrot.lane.b32.xlu0 %v366, 16
    %v538 = vpop.permute.xlu0 %537
    %vm540 = vcmask 257152
    %541 = vst.msk [vmem:[%s3] sm:$0xf] %vm540, %v538
    %543 = vrot.lane.b32.xlu0 %v536, 64
    %v544 = vpop.permute.xlu0 %543
    %vm546 = vcmask 519424
    %547 = vst.msk [vmem:[%s4] sm:$0xf] %vm546, %v544
    %v548 = vmul.f32 %v536, %v331
    %550 = vrot.lane.b32.xlu0 %v548, 32
    %v551 = vpop.permute.xlu0 %550
    %v553 = vsel %vm327, %v551, 0.0
    %554 = vadd.xlane.f32.xlu0 %v553
    %v555 = vpop.xlane.xlu0 %554
    %v556 = vmul.f32 %v530, %v118
    %558 = vrot.lane.b32.xlu0 %v556, 96
    %v559 = vpop.permute.xlu0 %558
    %v561 = vsel %vm327, %v559, 0.0
    %562 = vadd.xlane.f32.xlu0 %v561
    %v563 = vpop.xlane.xlu0 %562
    %v564 = vadd.f32 %v114, %v555
    %v565 = vadd.f32 %v564, %v563
    %v566 = vsel %vm133, %v565, -inf
    %567 = vmax.xlane.f32.xlu0 %v566
    %v568 = vpop.xlane.xlu0 %567
    %v569 = vsub.f32 %v565, %v568
    %v570 = vmul.f32 %v569, 1.442695
    %v571 = vpow.pop %v570
    %v572 = vsel %vm133, %v571, 0.0
    %573 = vadd.xlane.f32.xlu0 %v572
    %v574 = vpop.xlane.xlu0 %573
    %v575 = vrcp.pop %v574
    %v576 = vmul.f32 %v571, %v575
    %577 = vrot.lane.b32.xlu0 %v43, 96
    %v578 = vpop.permute.xlu0 %577
    %v580 = vmul.f32 %v576, %v578
    %581 = vrot.lane.b32.xlu0 %v536, 32
    %v582 = vpop.permute.xlu0 %581
    %v583 = vsel %vm120, %v582, 0
    %585 = vmatprep.subr.mxu0 0.0
    %586 = vmatpush1.msra.mxu0 %v46
    %587 = vmatprep.subr.mxu0 0.0
    %588 = vmatpush1.msra.mxu0 %v47
    %589 = vmatprep.subr.mxu0 0.0
    %590 = vmatpush1.msra.mxu0 %v48
    %591 = vmatprep.subr.mxu0 0.0
    %592 = vmatpush1.msra.mxu0 %v49
    %593 = vmatprep.subr.mxu0 0.0
    %594 = vmatpush1.msra.mxu0 0.0
    %595 = vmatprep.subr.mxu0 0.0
    %596 = vmatpush1.msra.mxu0 0.0
    %597 = vmatprep.subr.mxu0 0.0
    %598 = vmatpush1.msra.mxu0 0.0
    %599 = vmatprep.subr.mxu0 0.0
    %600 = vmatpush1.msra.mxu0 0.0
    %601 = vmatprep.subr.mxu0 0.0
    %602 = vmatpush1.msra.mxu0 0.0
    %603 = vmatprep.subr.mxu0 0.0
    %604 = vmatpush1.msra.mxu0 0.0
    %605 = vmatprep.subr.mxu0 0.0
    %606 = vmatpush1.msra.mxu0 0.0
    %607 = vmatprep.subr.mxu0 0.0
    %608 = vmatpush1.msra.mxu0 0.0
    %609 = vmatprep.subr.mxu0 0.0
    %610 = vmatpush1.msra.mxu0 0.0
    %611 = vmatprep.subr.mxu0 0.0
    %612 = vmatpush1.msra.mxu0 0.0
    %613 = vmatprep.subr.mxu0 0.0
    %614 = vmatpush1.msra.mxu0 0.0
    %615 = vmatprep.subr.mxu0 0.0
    %616 = vmatpush1.msra.mxu0 0.0
    %617 = vmatprep.subr.mxu0 0.0
    %618 = vmatpush1.msra.mxu0 0.0
    %619 = vmatprep.subr.mxu0 0.0
    %620 = vmatpush1.msra.mxu0 0.0
    %621 = vmatprep.subr.mxu0 0.0
    %622 = vmatpush1.msra.mxu0 0.0
    %623 = vmatprep.subr.mxu0 0.0
    %624 = vmatpush1.msra.mxu0 0.0
    %625 = vmatprep.subr.mxu0 0.0
    %626 = vmatpush1.msra.mxu0 0.0
    %627 = vmatprep.subr.mxu0 0.0
    %628 = vmatpush1.msra.mxu0 0.0
    %629 = vmatprep.subr.mxu0 0.0
    %630 = vmatpush1.msra.mxu0 0.0
    %631 = vmatprep.subr.mxu0 0.0
    %632 = vmatpush1.msra.mxu0 0.0
    %633 = vmatprep.subr.mxu0 0.0
    %634 = vmatpush1.msra.mxu0 0.0
    %635 = vmatprep.subr.mxu0 0.0
    %636 = vmatpush1.msra.mxu0 0.0
    %637 = vmatprep.subr.mxu0 0.0
    %638 = vmatpush1.msra.mxu0 0.0
    %639 = vmatprep.subr.mxu0 0.0
    %640 = vmatpush1.msra.mxu0 0.0
    %641 = vmatprep.subr.mxu0 0.0
    %642 = vmatpush1.msra.mxu0 0.0
    %643 = vmatprep.subr.mxu0 0.0
    %644 = vmatpush1.msra.mxu0 0.0
    %645 = vmatprep.subr.mxu0 0.0
    %646 = vmatpush1.msra.mxu0 0.0
    %647 = vmatprep.subr.mxu0 0.0
    %648 = vmatpush1.msra.mxu0 0.0
    %649 = vmatprep.mubr.f32.mxu0 0.0
    %650 = vmatmul.mubr.f32.gmra.mrb[0].mxu0 %v583
    %v651 = vpop.f32.mrb[0].mxu0
    %v652 = vadd.f32 0.0, %v651
    %v653 = vpop.f32.mrb[0].mxu0
    %654 = vdwg.mxu0
    %v656 = vsel %vm219, %v580, 0
    %658 = vmatprep.subr.mxu0 0.0
    %659 = vmatpush1.msra.mxu0 %v44
    %660 = vmatprep.subr.mxu0 0.0
    %661 = vmatpush1.msra.mxu0 %v45
    %662 = vmatprep.subr.mxu0 0.0
    %663 = vmatpush1.msra.mxu0 0.0
    %664 = vmatprep.subr.mxu0 0.0
    %665 = vmatpush1.msra.mxu0 0.0
    %666 = vmatprep.subr.mxu0 0.0
    %667 = vmatpush1.msra.mxu0 0.0
    %668 = vmatprep.subr.mxu0 0.0
    %669 = vmatpush1.msra.mxu0 0.0
    %670 = vmatprep.subr.mxu0 0.0
    %671 = vmatpush1.msra.mxu0 0.0
    %672 = vmatprep.subr.mxu0 0.0
    %673 = vmatpush1.msra.mxu0 0.0
    %674 = vmatprep.subr.mxu0 0.0
    %675 = vmatpush1.msra.mxu0 0.0
    %676 = vmatprep.subr.mxu0 0.0
    %677 = vmatpush1.msra.mxu0 0.0
    %678 = vmatprep.subr.mxu0 0.0
    %679 = vmatpush1.msra.mxu0 0.0
    %680 = vmatprep.subr.mxu0 0.0
    %681 = vmatpush1.msra.mxu0 0.0
    %682 = vmatprep.subr.mxu0 0.0
    %683 = vmatpush1.msra.mxu0 0.0
    %684 = vmatprep.subr.mxu0 0.0
    %685 = vmatpush1.msra.mxu0 0.0
    %686 = vmatprep.subr.mxu0 0.0
    %687 = vmatpush1.msra.mxu0 0.0
    %688 = vmatprep.subr.mxu0 0.0
    %689 = vmatpush1.msra.mxu0 0.0
    %690 = vmatprep.subr.mxu0 0.0
    %691 = vmatpush1.msra.mxu0 0.0
    %692 = vmatprep.subr.mxu0 0.0
    %693 = vmatpush1.msra.mxu0 0.0
    %694 = vmatprep.subr.mxu0 0.0
    %695 = vmatpush1.msra.mxu0 0.0
    %696 = vmatprep.subr.mxu0 0.0
    %697 = vmatpush1.msra.mxu0 0.0
    %698 = vmatprep.subr.mxu0 0.0
    %699 = vmatpush1.msra.mxu0 0.0
    %700 = vmatprep.subr.mxu0 0.0
    %701 = vmatpush1.msra.mxu0 0.0
    %702 = vmatprep.subr.mxu0 0.0
    %703 = vmatpush1.msra.mxu0 0.0
    %704 = vmatprep.subr.mxu0 0.0
    %705 = vmatpush1.msra.mxu0 0.0
    %706 = vmatprep.subr.mxu0 0.0
    %707 = vmatpush1.msra.mxu0 0.0
    %708 = vmatprep.subr.mxu0 0.0
    %709 = vmatpush1.msra.mxu0 0.0
    %710 = vmatprep.subr.mxu0 0.0
    %711 = vmatpush1.msra.mxu0 0.0
    %712 = vmatprep.subr.mxu0 0.0
    %713 = vmatpush1.msra.mxu0 0.0
    %714 = vmatprep.subr.mxu0 0.0
    %715 = vmatpush1.msra.mxu0 0.0
    %716 = vmatprep.subr.mxu0 0.0
    %717 = vmatpush1.msra.mxu0 0.0
    %718 = vmatprep.subr.mxu0 0.0
    %719 = vmatpush1.msra.mxu0 0.0
    %720 = vmatprep.subr.mxu0 0.0
    %721 = vmatpush1.msra.mxu0 0.0
    %722 = vmatprep.mubr.f32.mxu0 0.0
    %723 = vmatmul.mubr.f32.gmra.mrb[0].mxu0 %v656
    %v724 = vpop.f32.mrb[0].mxu0
    %v725 = vadd.f32 %v652, %v724
    %v726 = vpop.f32.mrb[0].mxu0
    %727 = vdwg.mxu0
    %v728 = vadd.f32 %v725, %v296
    %v729 = vxor.u32 %v728, 2147483648
    %v730 = vmul.f32 %v729, 1.442695
    %v731 = vpow.pop %v730
    %v732 = vadd.f32 %v731, 1.0
    %v733 = vrcp.pop %v732
    %v734 = vmul.f32 1.0, %v733
    %v735 = vtanh.pop %v728
    %v736 = vmul.f32 %v734, %v530
    %738 = vrot.lane.b32.xlu0 %v735, 64
    %v739 = vpop.permute.xlu0 %738
    %v741 = vmul.f32 %v734, %v739
    %743 = vrot.lane.b32.xlu0 %v741, 32
    %v744 = vpop.permute.xlu0 %743
    %v746 = vadd.f32 %v736, %v744
    %v747 = vtanh.pop %v746
    %749 = vrot.lane.b32.xlu0 %v747, 64
    %v750 = vpop.permute.xlu0 %749
    %v752 = vmul.f32 %v734, %v750
    %753 = vrot.lane.b32.xlu0 %v580, 32
    %v754 = vpop.permute.xlu0 %753
    %vm756 = vcmask 388352
    %757 = vst.msk [vmem:[%s3] sm:$0xf] %vm756, %v754
    %759 = vrot.lane.b32.xlu0 %v752, 96
    %v760 = vpop.permute.xlu0 %759
    %vm762 = vcmask 781824
    %763 = vst.msk [vmem:[%s4] sm:$0xf] %vm762, %v760
    %v764 = vmul.f32 %v752, %v331
    %766 = vrot.lane.b32.xlu0 %v764, 32
    %v767 = vpop.permute.xlu0 %766
    %v769 = vsel %vm327, %v767, 0.0
    %770 = vadd.xlane.f32.xlu0 %v769
    %v771 = vpop.xlane.xlu0 %770
    %v772 = vmul.f32 %v746, %v118
    %774 = vrot.lane.b32.xlu0 %v772, 96
    %v775 = vpop.permute.xlu0 %774
    %v777 = vsel %vm327, %v775, 0.0
    %778 = vadd.xlane.f32.xlu0 %v777
    %v779 = vpop.xlane.xlu0 %778
    %v780 = vadd.f32 %v114, %v771
    %v781 = vadd.f32 %v780, %v779
    %v782 = vsel %vm133, %v781, -inf
    %783 = vmax.xlane.f32.xlu0 %v782
    %v784 = vpop.xlane.xlu0 %783
    %v785 = vsub.f32 %v781, %v784
    %v786 = vmul.f32 %v785, 1.442695
    %v787 = vpow.pop %v786
    %v788 = vsel %vm133, %v787, 0.0
    %789 = vadd.xlane.f32.xlu0 %v788
    %v790 = vpop.xlane.xlu0 %789
    %v791 = vrcp.pop %v790
    %v792 = vmul.f32 %v787, %v791
    %793 = vrot.lane.b32.xlu0 %v43, 80
    %v794 = vpop.permute.xlu0 %793
    %v796 = vmul.f32 %v792, %v794
    %797 = vrot.lane.b32.xlu0 %v752, 32
    %v798 = vpop.permute.xlu0 %797
    %v799 = vsel %vm120, %v798, 0
    %801 = vmatprep.subr.mxu0 0.0
    %802 = vmatpush1.msra.mxu0 %v46
    %803 = vmatprep.subr.mxu0 0.0
    %804 = vmatpush1.msra.mxu0 %v47
    %805 = vmatprep.subr.mxu0 0.0
    %806 = vmatpush1.msra.mxu0 %v48
    %807 = vmatprep.subr.mxu0 0.0
    %808 = vmatpush1.msra.mxu0 %v49
    %809 = vmatprep.subr.mxu0 0.0
    %810 = vmatpush1.msra.mxu0 0.0
    %811 = vmatprep.subr.mxu0 0.0
    %812 = vmatpush1.msra.mxu0 0.0
    %813 = vmatprep.subr.mxu0 0.0
    %814 = vmatpush1.msra.mxu0 0.0
    %815 = vmatprep.subr.mxu0 0.0
    %816 = vmatpush1.msra.mxu0 0.0
    %817 = vmatprep.subr.mxu0 0.0
    %818 = vmatpush1.msra.mxu0 0.0
    %819 = vmatprep.subr.mxu0 0.0
    %820 = vmatpush1.msra.mxu0 0.0
    %821 = vmatprep.subr.mxu0 0.0
    %822 = vmatpush1.msra.mxu0 0.0
    %823 = vmatprep.subr.mxu0 0.0
    %824 = vmatpush1.msra.mxu0 0.0
    %825 = vmatprep.subr.mxu0 0.0
    %826 = vmatpush1.msra.mxu0 0.0
    %827 = vmatprep.subr.mxu0 0.0
    %828 = vmatpush1.msra.mxu0 0.0
    %829 = vmatprep.subr.mxu0 0.0
    %830 = vmatpush1.msra.mxu0 0.0
    %831 = vmatprep.subr.mxu0 0.0
    %832 = vmatpush1.msra.mxu0 0.0
    %833 = vmatprep.subr.mxu0 0.0
    %834 = vmatpush1.msra.mxu0 0.0
    %835 = vmatprep.subr.mxu0 0.0
    %836 = vmatpush1.msra.mxu0 0.0
    %837 = vmatprep.subr.mxu0 0.0
    %838 = vmatpush1.msra.mxu0 0.0
    %839 = vmatprep.subr.mxu0 0.0
    %840 = vmatpush1.msra.mxu0 0.0
    %841 = vmatprep.subr.mxu0 0.0
    %842 = vmatpush1.msra.mxu0 0.0
    %843 = vmatprep.subr.mxu0 0.0
    %844 = vmatpush1.msra.mxu0 0.0
    %845 = vmatprep.subr.mxu0 0.0
    %846 = vmatpush1.msra.mxu0 0.0
    %847 = vmatprep.subr.mxu0 0.0
    %848 = vmatpush1.msra.mxu0 0.0
    %849 = vmatprep.subr.mxu0 0.0
    %850 = vmatpush1.msra.mxu0 0.0
    %851 = vmatprep.subr.mxu0 0.0
    %852 = vmatpush1.msra.mxu0 0.0
    %853 = vmatprep.subr.mxu0 0.0
    %854 = vmatpush1.msra.mxu0 0.0
    %855 = vmatprep.subr.mxu0 0.0
    %856 = vmatpush1.msra.mxu0 0.0
    %857 = vmatprep.subr.mxu0 0.0
    %858 = vmatpush1.msra.mxu0 0.0
    %859 = vmatprep.subr.mxu0 0.0
    %860 = vmatpush1.msra.mxu0 0.0
    %861 = vmatprep.subr.mxu0 0.0
    %862 = vmatpush1.msra.mxu0 0.0
    %863 = vmatprep.subr.mxu0 0.0
    %864 = vmatpush1.msra.mxu0 0.0
    %865 = vmatprep.mubr.f32.mxu0 0.0
    %866 = vmatmul.mubr.f32.gmra.mrb[0].mxu0 %v799
    %v867 = vpop.f32.mrb[0].mxu0
    %v868 = vadd.f32 0.0, %v867
    %v869 = vpop.f32.mrb[0].mxu0
    %870 = vdwg.mxu0
    %v872 = vsel %vm219, %v796, 0
    %874 = vmatprep.subr.mxu0 0.0
    %875 = vmatpush1.msra.mxu0 %v44
    %876 = vmatprep.subr.mxu0 0.0
    %877 = vmatpush1.msra.mxu0 %v45
    %878 = vmatprep.subr.mxu0 0.0
    %879 = vmatpush1.msra.mxu0 0.0
    %880 = vmatprep.subr.mxu0 0.0
    %881 = vmatpush1.msra.mxu0 0.0
    %882 = vmatprep.subr.mxu0 0.0
    %883 = vmatpush1.msra.mxu0 0.0
    %884 = vmatprep.subr.mxu0 0.0
    %885 = vmatpush1.msra.mxu0 0.0
    %886 = vmatprep.subr.mxu0 0.0
    %887 = vmatpush1.msra.mxu0 0.0
    %888 = vmatprep.subr.mxu0 0.0
    %889 = vmatpush1.msra.mxu0 0.0
    %890 = vmatprep.subr.mxu0 0.0
    %891 = vmatpush1.msra.mxu0 0.0
    %892 = vmatprep.subr.mxu0 0.0
    %893 = vmatpush1.msra.mxu0 0.0
    %894 = vmatprep.subr.mxu0 0.0
    %895 = vmatpush1.msra.mxu0 0.0
    %896 = vmatprep.subr.mxu0 0.0
    %897 = vmatpush1.msra.mxu0 0.0
    %898 = vmatprep.subr.mxu0 0.0
    %899 = vmatpush1.msra.mxu0 0.0
    %900 = vmatprep.subr.mxu0 0.0
    %901 = vmatpush1.msra.mxu0 0.0
    %902 = vmatprep.subr.mxu0 0.0
    %903 = vmatpush1.msra.mxu0 0.0
    %904 = vmatprep.subr.mxu0 0.0
    %905 = vmatpush1.msra.mxu0 0.0
    %906 = vmatprep.subr.mxu0 0.0
    %907 = vmatpush1.msra.mxu0 0.0
    %908 = vmatprep.subr.mxu0 0.0
    %909 = vmatpush1.msra.mxu0 0.0
    %910 = vmatprep.subr.mxu0 0.0
    %911 = vmatpush1.msra.mxu0 0.0
    %912 = vmatprep.subr.mxu0 0.0
    %913 = vmatpush1.msra.mxu0 0.0
    %914 = vmatprep.subr.mxu0 0.0
    %915 = vmatpush1.msra.mxu0 0.0
    %916 = vmatprep.subr.mxu0 0.0
    %917 = vmatpush1.msra.mxu0 0.0
    %918 = vmatprep.subr.mxu0 0.0
    %919 = vmatpush1.msra.mxu0 0.0
    %920 = vmatprep.subr.mxu0 0.0
    %921 = vmatpush1.msra.mxu0 0.0
    %922 = vmatprep.subr.mxu0 0.0
    %923 = vmatpush1.msra.mxu0 0.0
    %924 = vmatprep.subr.mxu0 0.0
    %925 = vmatpush1.msra.mxu0 0.0
    %926 = vmatprep.subr.mxu0 0.0
    %927 = vmatpush1.msra.mxu0 0.0
    %928 = vmatprep.subr.mxu0 0.0
    %929 = vmatpush1.msra.mxu0 0.0
    %930 = vmatprep.subr.mxu0 0.0
    %931 = vmatpush1.msra.mxu0 0.0
    %932 = vmatprep.subr.mxu0 0.0
    %933 = vmatpush1.msra.mxu0 0.0
    %934 = vmatprep.subr.mxu0 0.0
    %935 = vmatpush1.msra.mxu0 0.0
    %936 = vmatprep.subr.mxu0 0.0
    %937 = vmatpush1.msra.mxu0 0.0
    %938 = vmatprep.mubr.f32.mxu0 0.0
    %939 = vmatmul.mubr.f32.gmra.mrb[0].mxu0 %v872
    %v940 = vpop.f32.mrb[0].mxu0
    %v941 = vadd.f32 %v868, %v940
    %v942 = vpop.f32.mrb[0].mxu0
    %943 = vdwg.mxu0
    %v944 = vadd.f32 %v941, %v296
    %v945 = vxor.u32 %v944, 2147483648
    %v946 = vmul.f32 %v945, 1.442695
    %v947 = vpow.pop %v946
    %v948 = vadd.f32 %v947, 1.0
    %v949 = vrcp.pop %v948
    %v950 = vmul.f32 1.0, %v949
    %v951 = vtanh.pop %v944
    %v952 = vmul.f32 %v950, %v746
    %954 = vrot.lane.b32.xlu0 %v951, 64
    %v955 = vpop.permute.xlu0 %954
    %v957 = vmul.f32 %v950, %v955
    %959 = vrot.lane.b32.xlu0 %v957, 32
    %v960 = vpop.permute.xlu0 %959
    %v962 = vadd.f32 %v952, %v960
    %v963 = vtanh.pop %v962
    %965 = vrot.lane.b32.xlu0 %v963, 64
    %v966 = vpop.permute.xlu0 %965
    %v968 = vmul.f32 %v950, %v966
    %969 = vrot.lane.b32.xlu0 %v796, 48
    %v970 = vpop.permute.xlu0 %969
    %vm972 = vcmask 519552
    %973 = vst.msk [vmem:[%s3] sm:$0xf] %vm972, %v970
    %vm974 = vcmask 1044224
    %975 = vst.msk [vmem:[%s4] sm:$0xf] %vm974, %v968
    %v976 = vmul.f32 %v968, %v331
    %978 = vrot.lane.b32.xlu0 %v976, 32
    %v979 = vpop.permute.xlu0 %978
    %v981 = vsel %vm327, %v979, 0.0
    %982 = vadd.xlane.f32.xlu0 %v981
    %v983 = vpop.xlane.xlu0 %982
    %v984 = vmul.f32 %v962, %v118
    %986 = vrot.lane.b32.xlu0 %v984, 96
    %v987 = vpop.permute.xlu0 %986
    %v989 = vsel %vm327, %v987, 0.0
    %990 = vadd.xlane.f32.xlu0 %v989
    %v991 = vpop.xlane.xlu0 %990
    %v992 = vadd.f32 %v114, %v983
    %v993 = vadd.f32 %v992, %v991
    %v994 = vsel %vm133, %v993, -inf
    %995 = vmax.xlane.f32.xlu0 %v994
    %v996 = vpop.xlane.xlu0 %995
    %v997 = vsub.f32 %v993, %v996
    %v998 = vmul.f32 %v997, 1.442695
    %v999 = vpow.pop %v998
    %v1000 = vsel %vm133, %v999, 0.0
    %1001 = vadd.xlane.f32.xlu0 %v1000
    %v1002 = vpop.xlane.xlu0 %1001
    %v1003 = vrcp.pop %v1002
    %v1004 = vmul.f32 %v999, %v1003
    %1005 = vrot.lane.b32.xlu0 %v43, 64
    %v1006 = vpop.permute.xlu0 %1005
    %v1008 = vmul.f32 %v1004, %v1006
    %1010 = vrot.lane.b32.xlu0 %v968, 32
    %v1011 = vpop.permute.xlu0 %1010
    %v1012 = vsel %vm120, %v1011, 0
    %1014 = vmatprep.subr.mxu0 0.0
    %1015 = vmatpush1.msra.mxu0 %v46
    %1016 = vmatprep.subr.mxu0 0.0
    %1017 = vmatpush1.msra.mxu0 %v47
    %1018 = vmatprep.subr.mxu0 0.0
    %1019 = vmatpush1.msra.mxu0 %v48
    %1020 = vmatprep.subr.mxu0 0.0
    %1021 = vmatpush1.msra.mxu0 %v49
    %1022 = vmatprep.subr.mxu0 0.0
    %1023 = vmatpush1.msra.mxu0 0.0
    %1024 = vmatprep.subr.mxu0 0.0
    %1025 = vmatpush1.msra.mxu0 0.0
    %1026 = vmatprep.subr.mxu0 0.0
    %1027 = vmatpush1.msra.mxu0 0.0
    %1028 = vmatprep.subr.mxu0 0.0
    %1029 = vmatpush1.msra.mxu0 0.0
    %1030 = vmatprep.subr.mxu0 0.0
    %1031 = vmatpush1.msra.mxu0 0.0
    %1032 = vmatprep.subr.mxu0 0.0
    %1033 = vmatpush1.msra.mxu0 0.0
    %1034 = vmatprep.subr.mxu0 0.0
    %1035 = vmatpush1.msra.mxu0 0.0
    %1036 = vmatprep.subr.mxu0 0.0
    %1037 = vmatpush1.msra.mxu0 0.0
    %1038 = vmatprep.subr.mxu0 0.0
    %1039 = vmatpush1.msra.mxu0 0.0
    %1040 = vmatprep.subr.mxu0 0.0
    %1041 = vmatpush1.msra.mxu0 0.0
    %1042 = vmatprep.subr.mxu0 0.0
    %1043 = vmatpush1.msra.mxu0 0.0
    %1044 = vmatprep.subr.mxu0 0.0
    %1045 = vmatpush1.msra.mxu0 0.0
    %1046 = vmatprep.subr.mxu0 0.0
    %1047 = vmatpush1.msra.mxu0 0.0
    %1048 = vmatprep.subr.mxu0 0.0
    %1049 = vmatpush1.msra.mxu0 0.0
    %1050 = vmatprep.subr.mxu0 0.0
    %1051 = vmatpush1.msra.mxu0 0.0
    %1052 = vmatprep.subr.mxu0 0.0
    %1053 = vmatpush1.msra.mxu0 0.0
    %1054 = vmatprep.subr.mxu0 0.0
    %1055 = vmatpush1.msra.mxu0 0.0
    %1056 = vmatprep.subr.mxu0 0.0
    %1057 = vmatpush1.msra.mxu0 0.0
    %1058 = vmatprep.subr.mxu0 0.0
    %1059 = vmatpush1.msra.mxu0 0.0
    %1060 = vmatprep.subr.mxu0 0.0
    %1061 = vmatpush1.msra.mxu0 0.0
    %1062 = vmatprep.subr.mxu0 0.0
    %1063 = vmatpush1.msra.mxu0 0.0
    %1064 = vmatprep.subr.mxu0 0.0
    %1065 = vmatpush1.msra.mxu0 0.0
    %1066 = vmatprep.subr.mxu0 0.0
    %1067 = vmatpush1.msra.mxu0 0.0
    %1068 = vmatprep.subr.mxu0 0.0
    %1069 = vmatpush1.msra.mxu0 0.0
    %1070 = vmatprep.subr.mxu0 0.0
    %1071 = vmatpush1.msra.mxu0 0.0
    %1072 = vmatprep.subr.mxu0 0.0
    %1073 = vmatpush1.msra.mxu0 0.0
    %1074 = vmatprep.subr.mxu0 0.0
    %1075 = vmatpush1.msra.mxu0 0.0
    %1076 = vmatprep.subr.mxu0 0.0
    %1077 = vmatpush1.msra.mxu0 0.0
    %1078 = vmatprep.mubr.f32.mxu0 0.0
    %1079 = vmatmul.mubr.f32.gmra.mrb[0].mxu0 %v1012
    %v1080 = vpop.f32.mrb[0].mxu0
    %v1081 = vadd.f32 0.0, %v1080
    %v1082 = vpop.f32.mrb[0].mxu0
    %1083 = vdwg.mxu0
    %v1085 = vsel %vm219, %v1008, 0
    %1087 = vmatprep.subr.mxu0 0.0
    %1088 = vmatpush1.msra.mxu0 %v44
    %1089 = vmatprep.subr.mxu0 0.0
    %1090 = vmatpush1.msra.mxu0 %v45
    %1091 = vmatprep.subr.mxu0 0.0
    %1092 = vmatpush1.msra.mxu0 0.0
    %1093 = vmatprep.subr.mxu0 0.0
    %1094 = vmatpush1.msra.mxu0 0.0
    %1095 = vmatprep.subr.mxu0 0.0
    %1096 = vmatpush1.msra.mxu0 0.0
    %1097 = vmatprep.subr.mxu0 0.0
    %1098 = vmatpush1.msra.mxu0 0.0
    %1099 = vmatprep.subr.mxu0 0.0
    %1100 = vmatpush1.msra.mxu0 0.0
    %1101 = vmatprep.subr.mxu0 0.0
    %1102 = vmatpush1.msra.mxu0 0.0
    %1103 = vmatprep.subr.mxu0 0.0
    %1104 = vmatpush1.msra.mxu0 0.0
    %1105 = vmatprep.subr.mxu0 0.0
    %1106 = vmatpush1.msra.mxu0 0.0
    %1107 = vmatprep.subr.mxu0 0.0
    %1108 = vmatpush1.msra.mxu0 0.0
    %1109 = vmatprep.subr.mxu0 0.0
    %1110 = vmatpush1.msra.mxu0 0.0
    %1111 = vmatprep.subr.mxu0 0.0
    %1112 = vmatpush1.msra.mxu0 0.0
    %1113 = vmatprep.subr.mxu0 0.0
    %1114 = vmatpush1.msra.mxu0 0.0
    %1115 = vmatprep.subr.mxu0 0.0
    %1116 = vmatpush1.msra.mxu0 0.0
    %1117 = vmatprep.subr.mxu0 0.0
    %1118 = vmatpush1.msra.mxu0 0.0
    %1119 = vmatprep.subr.mxu0 0.0
    %1120 = vmatpush1.msra.mxu0 0.0
    %1121 = vmatprep.subr.mxu0 0.0
    %1122 = vmatpush1.msra.mxu0 0.0
    %1123 = vmatprep.subr.mxu0 0.0
    %1124 = vmatpush1.msra.mxu0 0.0
    %1125 = vmatprep.subr.mxu0 0.0
    %1126 = vmatpush1.msra.mxu0 0.0
    %1127 = vmatprep.subr.mxu0 0.0
    %1128 = vmatpush1.msra.mxu0 0.0
    %1129 = vmatprep.subr.mxu0 0.0
    %1130 = vmatpush1.msra.mxu0 0.0
    %1131 = vmatprep.subr.mxu0 0.0
    %1132 = vmatpush1.msra.mxu0 0.0
    %1133 = vmatprep.subr.mxu0 0.0
    %1134 = vmatpush1.msra.mxu0 0.0
    %1135 = vmatprep.subr.mxu0 0.0
    %1136 = vmatpush1.msra.mxu0 0.0
    %1137 = vmatprep.subr.mxu0 0.0
    %1138 = vmatpush1.msra.mxu0 0.0
    %1139 = vmatprep.subr.mxu0 0.0
    %1140 = vmatpush1.msra.mxu0 0.0
    %1141 = vmatprep.subr.mxu0 0.0
    %1142 = vmatpush1.msra.mxu0 0.0
    %1143 = vmatprep.subr.mxu0 0.0
    %1144 = vmatpush1.msra.mxu0 0.0
    %1145 = vmatprep.subr.mxu0 0.0
    %1146 = vmatpush1.msra.mxu0 0.0
    %1147 = vmatprep.subr.mxu0 0.0
    %1148 = vmatpush1.msra.mxu0 0.0
    %1149 = vmatprep.subr.mxu0 0.0
    %1150 = vmatpush1.msra.mxu0 0.0
    %1151 = vmatprep.mubr.f32.mxu0 0.0
    %1152 = vmatmul.mubr.f32.gmra.mrb[0].mxu0 %v1085
    %v1153 = vpop.f32.mrb[0].mxu0
    %v1154 = vadd.f32 %v1081, %v1153
    %v1155 = vpop.f32.mrb[0].mxu0
    %1156 = vdwg.mxu0
    %v1157 = vadd.f32 %v1154, %v296
    %v1158 = vxor.u32 %v1157, 2147483648
    %v1159 = vmul.f32 %v1158, 1.442695
    %v1160 = vpow.pop %v1159
    %v1161 = vadd.f32 %v1160, 1.0
    %v1162 = vrcp.pop %v1161
    %v1163 = vmul.f32 1.0, %v1162
    %v1164 = vtanh.pop %v1157
    %v1165 = vmul.f32 %v1163, %v962
    %1167 = vrot.lane.b32.xlu0 %v1164, 64
    %v1168 = vpop.permute.xlu0 %1167
    %v1170 = vmul.f32 %v1163, %v1168
    %1172 = vrot.lane.b32.xlu0 %v1170, 32
    %v1173 = vpop.permute.xlu0 %1172
    %v1175 = vadd.f32 %v1165, %v1173
    %v1176 = vtanh.pop %v1175
    %1178 = vrot.lane.b32.xlu0 %v1176, 64
    %v1179 = vpop.permute.xlu0 %1178
    %v1181 = vmul.f32 %v1163, %v1179
    %1182 = vrot.lane.b32.xlu0 %v1008, 64
    %v1183 = vpop.permute.xlu0 %1182
    %vm1185 = vcmask 650752
    %1186 = vst.msk [vmem:[%s3] sm:$0xf] %vm1185, %v1183
    %1188 = vrot.lane.b32.xlu0 %v1181, 32
    %v1189 = vpop.permute.xlu0 %1188
    %1191 = vst.msk [vmem:[%s4 + $0x4] sm:$0xf] %vm327, %v1189
    %v1192 = vmul.f32 %v1181, %v331
    %1194 = vrot.lane.b32.xlu0 %v1192, 32
    %v1195 = vpop.permute.xlu0 %1194
    %v1197 = vsel %vm327, %v1195, 0.0
    %1198 = vadd.xlane.f32.xlu0 %v1197
    %v1199 = vpop.xlane.xlu0 %1198
    %v1200 = vmul.f32 %v1175, %v118
    %1202 = vrot.lane.b32.xlu0 %v1200, 96
    %v1203 = vpop.permute.xlu0 %1202
    %v1205 = vsel %vm327, %v1203, 0.0
    %1206 = vadd.xlane.f32.xlu0 %v1205
    %v1207 = vpop.xlane.xlu0 %1206
    %v1208 = vadd.f32 %v114, %v1199
    %v1209 = vadd.f32 %v1208, %v1207
    %v1210 = vsel %vm133, %v1209, -inf
    %1211 = vmax.xlane.f32.xlu0 %v1210
    %v1212 = vpop.xlane.xlu0 %1211
    %v1213 = vsub.f32 %v1209, %v1212
    %v1214 = vmul.f32 %v1213, 1.442695
    %v1215 = vpow.pop %v1214
    %v1216 = vsel %vm133, %v1215, 0.0
    %1217 = vadd.xlane.f32.xlu0 %v1216
    %v1218 = vpop.xlane.xlu0 %1217
    %v1219 = vrcp.pop %v1218
    %v1220 = vmul.f32 %v1215, %v1219
    %1221 = vrot.lane.b32.xlu0 %v43, 48
    %v1222 = vpop.permute.xlu0 %1221
    %v1224 = vmul.f32 %v1220, %v1222
    %v1225 = vsel %vm120, %v1189, 0
    %1227 = vmatprep.subr.mxu0 0.0
    %1228 = vmatpush1.msra.mxu0 %v46
    %1229 = vmatprep.subr.mxu0 0.0
    %1230 = vmatpush1.msra.mxu0 %v47
    %1231 = vmatprep.subr.mxu0 0.0
    %1232 = vmatpush1.msra.mxu0 %v48
    %1233 = vmatprep.subr.mxu0 0.0
    %1234 = vmatpush1.msra.mxu0 %v49
    %1235 = vmatprep.subr.mxu0 0.0
    %1236 = vmatpush1.msra.mxu0 0.0
    %1237 = vmatprep.subr.mxu0 0.0
    %1238 = vmatpush1.msra.mxu0 0.0
    %1239 = vmatprep.subr.mxu0 0.0
    %1240 = vmatpush1.msra.mxu0 0.0
    %1241 = vmatprep.subr.mxu0 0.0
    %1242 = vmatpush1.msra.mxu0 0.0
    %1243 = vmatprep.subr.mxu0 0.0
    %1244 = vmatpush1.msra.mxu0 0.0
    %1245 = vmatprep.subr.mxu0 0.0
    %1246 = vmatpush1.msra.mxu0 0.0
    %1247 = vmatprep.subr.mxu0 0.0
    %1248 = vmatpush1.msra.mxu0 0.0
    %1249 = vmatprep.subr.mxu0 0.0
    %1250 = vmatpush1.msra.mxu0 0.0
    %1251 = vmatprep.subr.mxu0 0.0
    %1252 = vmatpush1.msra.mxu0 0.0
    %1253 = vmatprep.subr.mxu0 0.0
    %1254 = vmatpush1.msra.mxu0 0.0
    %1255 = vmatprep.subr.mxu0 0.0
    %1256 = vmatpush1.msra.mxu0 0.0
    %1257 = vmatprep.subr.mxu0 0.0
    %1258 = vmatpush1.msra.mxu0 0.0
    %1259 = vmatprep.subr.mxu0 0.0
    %1260 = vmatpush1.msra.mxu0 0.0
    %1261 = vmatprep.subr.mxu0 0.0
    %1262 = vmatpush1.msra.mxu0 0.0
    %1263 = vmatprep.subr.mxu0 0.0
    %1264 = vmatpush1.msra.mxu0 0.0
    %1265 = vmatprep.subr.mxu0 0.0
    %1266 = vmatpush1.msra.mxu0 0.0
    %1267 = vmatprep.subr.mxu0 0.0
    %1268 = vmatpush1.msra.mxu0 0.0
    %1269 = vmatprep.subr.mxu0 0.0
    %1270 = vmatpush1.msra.mxu0 0.0
    %1271 = vmatprep.subr.mxu0 0.0
    %1272 = vmatpush1.msra.mxu0 0.0
    %1273 = vmatprep.subr.mxu0 0.0
    %1274 = vmatpush1.msra.mxu0 0.0
    %1275 = vmatprep.subr.mxu0 0.0
    %1276 = vmatpush1.msra.mxu0 0.0
    %1277 = vmatprep.subr.mxu0 0.0
    %1278 = vmatpush1.msra.mxu0 0.0
    %1279 = vmatprep.subr.mxu0 0.0
    %1280 = vmatpush1.msra.mxu0 0.0
    %1281 = vmatprep.subr.mxu0 0.0
    %1282 = vmatpush1.msra.mxu0 0.0
    %1283 = vmatprep.subr.mxu0 0.0
    %1284 = vmatpush1.msra.mxu0 0.0
    %1285 = vmatprep.subr.mxu0 0.0
    %1286 = vmatpush1.msra.mxu0 0.0
    %1287 = vmatprep.subr.mxu0 0.0
    %1288 = vmatpush1.msra.mxu0 0.0
    %1289 = vmatprep.subr.mxu0 0.0
    %1290 = vmatpush1.msra.mxu0 0.0
    %1291 = vmatprep.mubr.f32.mxu0 0.0
    %1292 = vmatmul.mubr.f32.gmra.mrb[0].mxu0 %v1225
    %v1293 = vpop.f32.mrb[0].mxu0
    %v1294 = vadd.f32 0.0, %v1293
    %v1295 = vpop.f32.mrb[0].mxu0
    %1296 = vdwg.mxu0
    %v1298 = vsel %vm219, %v1224, 0
    %1300 = vmatprep.subr.mxu0 0.0
    %1301 = vmatpush1.msra.mxu0 %v44
    %1302 = vmatprep.subr.mxu0 0.0
    %1303 = vmatpush1.msra.mxu0 %v45
    %1304 = vmatprep.subr.mxu0 0.0
    %1305 = vmatpush1.msra.mxu0 0.0
    %1306 = vmatprep.subr.mxu0 0.0
    %1307 = vmatpush1.msra.mxu0 0.0
    %1308 = vmatprep.subr.mxu0 0.0
    %1309 = vmatpush1.msra.mxu0 0.0
    %1310 = vmatprep.subr.mxu0 0.0
    %1311 = vmatpush1.msra.mxu0 0.0
    %1312 = vmatprep.subr.mxu0 0.0
    %1313 = vmatpush1.msra.mxu0 0.0
    %1314 = vmatprep.subr.mxu0 0.0
    %1315 = vmatpush1.msra.mxu0 0.0
    %1316 = vmatprep.subr.mxu0 0.0
    %1317 = vmatpush1.msra.mxu0 0.0
    %1318 = vmatprep.subr.mxu0 0.0
    %1319 = vmatpush1.msra.mxu0 0.0
    %1320 = vmatprep.subr.mxu0 0.0
    %1321 = vmatpush1.msra.mxu0 0.0
    %1322 = vmatprep.subr.mxu0 0.0
    %1323 = vmatpush1.msra.mxu0 0.0
    %1324 = vmatprep.subr.mxu0 0.0
    %1325 = vmatpush1.msra.mxu0 0.0
    %1326 = vmatprep.subr.mxu0 0.0
    %1327 = vmatpush1.msra.mxu0 0.0
    %1328 = vmatprep.subr.mxu0 0.0
    %1329 = vmatpush1.msra.mxu0 0.0
    %1330 = vmatprep.subr.mxu0 0.0
    %1331 = vmatpush1.msra.mxu0 0.0
    %1332 = vmatprep.subr.mxu0 0.0
    %1333 = vmatpush1.msra.mxu0 0.0
    %1334 = vmatprep.subr.mxu0 0.0
    %1335 = vmatpush1.msra.mxu0 0.0
    %1336 = vmatprep.subr.mxu0 0.0
    %1337 = vmatpush1.msra.mxu0 0.0
    %1338 = vmatprep.subr.mxu0 0.0
    %1339 = vmatpush1.msra.mxu0 0.0
    %1340 = vmatprep.subr.mxu0 0.0
    %1341 = vmatpush1.msra.mxu0 0.0
    %1342 = vmatprep.subr.mxu0 0.0
    %1343 = vmatpush1.msra.mxu0 0.0
    %1344 = vmatprep.subr.mxu0 0.0
    %1345 = vmatpush1.msra.mxu0 0.0
    %1346 = vmatprep.subr.mxu0 0.0
    %1347 = vmatpush1.msra.mxu0 0.0
    %1348 = vmatprep.subr.mxu0 0.0
    %1349 = vmatpush1.msra.mxu0 0.0
    %1350 = vmatprep.subr.mxu0 0.0
    %1351 = vmatpush1.msra.mxu0 0.0
    %1352 = vmatprep.subr.mxu0 0.0
    %1353 = vmatpush1.msra.mxu0 0.0
    %1354 = vmatprep.subr.mxu0 0.0
    %1355 = vmatpush1.msra.mxu0 0.0
    %1356 = vmatprep.subr.mxu0 0.0
    %1357 = vmatpush1.msra.mxu0 0.0
    %1358 = vmatprep.subr.mxu0 0.0
    %1359 = vmatpush1.msra.mxu0 0.0
    %1360 = vmatprep.subr.mxu0 0.0
    %1361 = vmatpush1.msra.mxu0 0.0
    %1362 = vmatprep.subr.mxu0 0.0
    %1363 = vmatpush1.msra.mxu0 0.0
    %1364 = vmatprep.mubr.f32.mxu0 0.0
    %1365 = vmatmul.mubr.f32.gmra.mrb[0].mxu0 %v1298
    %v1366 = vpop.f32.mrb[0].mxu0
    %v1367 = vadd.f32 %v1294, %v1366
    %v1368 = vpop.f32.mrb[0].mxu0
    %1369 = vdwg.mxu0
    %v1370 = vadd.f32 %v1367, %v296
    %v1371 = vxor.u32 %v1370, 2147483648
    %v1372 = vmul.f32 %v1371, 1.442695
    %v1373 = vpow.pop %v1372
    %v1374 = vadd.f32 %v1373, 1.0
    %v1375 = vrcp.pop %v1374
    %v1376 = vmul.f32 1.0, %v1375
    %v1377 = vtanh.pop %v1370
    %v1378 = vmul.f32 %v1376, %v1175
    %1380 = vrot.lane.b32.xlu0 %v1377, 64
    %v1381 = vpop.permute.xlu0 %1380
    %v1383 = vmul.f32 %v1376, %v1381
    %1385 = vrot.lane.b32.xlu0 %v1383, 32
    %v1386 = vpop.permute.xlu0 %1385
    %v1388 = vadd.f32 %v1378, %v1386
    %v1389 = vtanh.pop %v1388
    %1391 = vrot.lane.b32.xlu0 %v1389, 64
    %v1392 = vpop.permute.xlu0 %1391
    %v1394 = vmul.f32 %v1376, %v1392
    %1395 = vrot.lane.b32.xlu0 %v1224, 80
    %v1396 = vpop.permute.xlu0 %1395
    %vm1398 = vcmask 781952
    %1399 = vst.msk [vmem:[%s3] sm:$0xf] %vm1398, %v1396
    %1401 = vrot.lane.b32.xlu0 %v1394, 64
    %v1402 = vpop.permute.xlu0 %1401
    %1404 = vst.msk [vmem:[%s4 + $0x4] sm:$0xf] %vm546, %v1402
    %v1405 = vmul.f32 %v1394, %v331
    %1407 = vrot.lane.b32.xlu0 %v1405, 32
    %v1408 = vpop.permute.xlu0 %1407
    %v1410 = vsel %vm327, %v1408, 0.0
    %1411 = vadd.xlane.f32.xlu0 %v1410
    %v1412 = vpop.xlane.xlu0 %1411
    %v1413 = vmul.f32 %v1388, %v118
    %1415 = vrot.lane.b32.xlu0 %v1413, 96
    %v1416 = vpop.permute.xlu0 %1415
    %v1418 = vsel %vm327, %v1416, 0.0
    %1419 = vadd.xlane.f32.xlu0 %v1418
    %v1420 = vpop.xlane.xlu0 %1419
    %v1421 = vadd.f32 %v114, %v1412
    %v1422 = vadd.f32 %v1421, %v1420
    %v1423 = vsel %vm133, %v1422, -inf
    %1424 = vmax.xlane.f32.xlu0 %v1423
    %v1425 = vpop.xlane.xlu0 %1424
    %v1426 = vsub.f32 %v1422, %v1425
    %v1427 = vmul.f32 %v1426, 1.442695
    %v1428 = vpow.pop %v1427
    %v1429 = vsel %vm133, %v1428, 0.0
    %1430 = vadd.xlane.f32.xlu0 %v1429
    %v1431 = vpop.xlane.xlu0 %1430
    %v1432 = vrcp.pop %v1431
    %v1433 = vmul.f32 %v1428, %v1432
    %1434 = vrot.lane.b32.xlu0 %v43, 32
    %v1435 = vpop.permute.xlu0 %1434
    %v1437 = vmul.f32 %v1433, %v1435
    %1438 = vrot.lane.b32.xlu0 %v1394, 32
    %v1439 = vpop.permute.xlu0 %1438
    %v1440 = vsel %vm120, %v1439, 0
    %1442 = vmatprep.subr.mxu0 0.0
    %1443 = vmatpush1.msra.mxu0 %v46
    %1444 = vmatprep.subr.mxu0 0.0
    %1445 = vmatpush1.msra.mxu0 %v47
    %1446 = vmatprep.subr.mxu0 0.0
    %1447 = vmatpush1.msra.mxu0 %v48
    %1448 = vmatprep.subr.mxu0 0.0
    %1449 = vmatpush1.msra.mxu0 %v49
    %1450 = vmatprep.subr.mxu0 0.0
    %1451 = vmatpush1.msra.mxu0 0.0
    %1452 = vmatprep.subr.mxu0 0.0
    %1453 = vmatpush1.msra.mxu0 0.0
    %1454 = vmatprep.subr.mxu0 0.0
    %1455 = vmatpush1.msra.mxu0 0.0
    %1456 = vmatprep.subr.mxu0 0.0
    %1457 = vmatpush1.msra.mxu0 0.0
    %1458 = vmatprep.subr.mxu0 0.0
    %1459 = vmatpush1.msra.mxu0 0.0
    %1460 = vmatprep.subr.mxu0 0.0
    %1461 = vmatpush1.msra.mxu0 0.0
    %1462 = vmatprep.subr.mxu0 0.0
    %1463 = vmatpush1.msra.mxu0 0.0
    %1464 = vmatprep.subr.mxu0 0.0
    %1465 = vmatpush1.msra.mxu0 0.0
    %1466 = vmatprep.subr.mxu0 0.0
    %1467 = vmatpush1.msra.mxu0 0.0
    %1468 = vmatprep.subr.mxu0 0.0
    %1469 = vmatpush1.msra.mxu0 0.0
    %1470 = vmatprep.subr.mxu0 0.0
    %1471 = vmatpush1.msra.mxu0 0.0
    %1472 = vmatprep.subr.mxu0 0.0
    %1473 = vmatpush1.msra.mxu0 0.0
    %1474 = vmatprep.subr.mxu0 0.0
    %1475 = vmatpush1.msra.mxu0 0.0
    %1476 = vmatprep.subr.mxu0 0.0
    %1477 = vmatpush1.msra.mxu0 0.0
    %1478 = vmatprep.subr.mxu0 0.0
    %1479 = vmatpush1.msra.mxu0 0.0
    %1480 = vmatprep.subr.mxu0 0.0
    %1481 = vmatpush1.msra.mxu0 0.0
    %1482 = vmatprep.subr.mxu0 0.0
    %1483 = vmatpush1.msra.mxu0 0.0
    %1484 = vmatprep.subr.mxu0 0.0
    %1485 = vmatpush1.msra.mxu0 0.0
    %1486 = vmatprep.subr.mxu0 0.0
    %1487 = vmatpush1.msra.mxu0 0.0
    %1488 = vmatprep.subr.mxu0 0.0
    %1489 = vmatpush1.msra.mxu0 0.0
    %1490 = vmatprep.subr.mxu0 0.0
    %1491 = vmatpush1.msra.mxu0 0.0
    %1492 = vmatprep.subr.mxu0 0.0
    %1493 = vmatpush1.msra.mxu0 0.0
    %1494 = vmatprep.subr.mxu0 0.0
    %1495 = vmatpush1.msra.mxu0 0.0
    %1496 = vmatprep.subr.mxu0 0.0
    %1497 = vmatpush1.msra.mxu0 0.0
    %1498 = vmatprep.subr.mxu0 0.0
    %1499 = vmatpush1.msra.mxu0 0.0
    %1500 = vmatprep.subr.mxu0 0.0
    %1501 = vmatpush1.msra.mxu0 0.0
    %1502 = vmatprep.subr.mxu0 0.0
    %1503 = vmatpush1.msra.mxu0 0.0
    %1504 = vmatprep.subr.mxu0 0.0
    %1505 = vmatpush1.msra.mxu0 0.0
    %1506 = vmatprep.mubr.f32.mxu0 0.0
    %1507 = vmatmul.mubr.f32.gmra.mrb[0].mxu0 %v1440
    %v1508 = vpop.f32.mrb[0].mxu0
    %v1509 = vadd.f32 0.0, %v1508
    %v1510 = vpop.f32.mrb[0].mxu0
    %1511 = vdwg.mxu0
    %v1513 = vsel %vm219, %v1437, 0
    %1515 = vmatprep.subr.mxu0 0.0
    %1516 = vmatpush1.msra.mxu0 %v44
    %1517 = vmatprep.subr.mxu0 0.0
    %1518 = vmatpush1.msra.mxu0 %v45
    %1519 = vmatprep.subr.mxu0 0.0
    %1520 = vmatpush1.msra.mxu0 0.0
    %1521 = vmatprep.subr.mxu0 0.0
    %1522 = vmatpush1.msra.mxu0 0.0
    %1523 = vmatprep.subr.mxu0 0.0
    %1524 = vmatpush1.msra.mxu0 0.0
    %1525 = vmatprep.subr.mxu0 0.0
    %1526 = vmatpush1.msra.mxu0 0.0
    %1527 = vmatprep.subr.mxu0 0.0
    %1528 = vmatpush1.msra.mxu0 0.0
    %1529 = vmatprep.subr.mxu0 0.0
    %1530 = vmatpush1.msra.mxu0 0.0
    %1531 = vmatprep.subr.mxu0 0.0
    %1532 = vmatpush1.msra.mxu0 0.0
    %1533 = vmatprep.subr.mxu0 0.0
    %1534 = vmatpush1.msra.mxu0 0.0
    %1535 = vmatprep.subr.mxu0 0.0
    %1536 = vmatpush1.msra.mxu0 0.0
    %1537 = vmatprep.subr.mxu0 0.0
    %1538 = vmatpush1.msra.mxu0 0.0
    %1539 = vmatprep.subr.mxu0 0.0
    %1540 = vmatpush1.msra.mxu0 0.0
    %1541 = vmatprep.subr.mxu0 0.0
    %1542 = vmatpush1.msra.mxu0 0.0
    %1543 = vmatprep.subr.mxu0 0.0
    %1544 = vmatpush1.msra.mxu0 0.0
    %1545 = vmatprep.subr.mxu0 0.0
    %1546 = vmatpush1.msra.mxu0 0.0
    %1547 = vmatprep.subr.mxu0 0.0
    %1548 = vmatpush1.msra.mxu0 0.0
    %1549 = vmatprep.subr.mxu0 0.0
    %1550 = vmatpush1.msra.mxu0 0.0
    %1551 = vmatprep.subr.mxu0 0.0
    %1552 = vmatpush1.msra.mxu0 0.0
    %1553 = vmatprep.subr.mxu0 0.0
    %1554 = vmatpush1.msra.mxu0 0.0
    %1555 = vmatprep.subr.mxu0 0.0
    %1556 = vmatpush1.msra.mxu0 0.0
    %1557 = vmatprep.subr.mxu0 0.0
    %1558 = vmatpush1.msra.mxu0 0.0
    %1559 = vmatprep.subr.mxu0 0.0
    %1560 = vmatpush1.msra.mxu0 0.0
    %1561 = vmatprep.subr.mxu0 0.0
    %1562 = vmatpush1.msra.mxu0 0.0
    %1563 = vmatprep.subr.mxu0 0.0
    %1564 = vmatpush1.msra.mxu0 0.0
    %1565 = vmatprep.subr.mxu0 0.0
    %1566 = vmatpush1.msra.mxu0 0.0
    %1567 = vmatprep.subr.mxu0 0.0
    %1568 = vmatpush1.msra.mxu0 0.0
    %1569 = vmatprep.subr.mxu0 0.0
    %1570 = vmatpush1.msra.mxu0 0.0
    %1571 = vmatprep.subr.mxu0 0.0
    %1572 = vmatpush1.msra.mxu0 0.0
    %1573 = vmatprep.subr.mxu0 0.0
    %1574 = vmatpush1.msra.mxu0 0.0
    %1575 = vmatprep.subr.mxu0 0.0
    %1576 = vmatpush1.msra.mxu0 0.0
    %1577 = vmatprep.subr.mxu0 0.0
    %1578 = vmatpush1.msra.mxu0 0.0
    %1579 = vmatprep.mubr.f32.mxu0 0.0
    %1580 = vmatmul.mubr.f32.gmra.mrb[0].mxu0 %v1513
    %v1581 = vpop.f32.mrb[0].mxu0
    %v1582 = vadd.f32 %v1509, %v1581
    %v1583 = vpop.f32.mrb[0].mxu0
    %1584 = vdwg.mxu0
    %v1585 = vadd.f32 %v1582, %v296
    %v1586 = vxor.u32 %v1585, 2147483648
    %v1587 = vmul.f32 %v1586, 1.442695
    %v1588 = vpow.pop %v1587
    %v1589 = vadd.f32 %v1588, 1.0
    %v1590 = vrcp.pop %v1589
    %v1591 = vmul.f32 1.0, %v1590
    %v1592 = vtanh.pop %v1585
    %v1593 = vmul.f32 %v1591, %v1388
    %1595 = vrot.lane.b32.xlu0 %v1592, 64
    %v1596 = vpop.permute.xlu0 %1595
    %v1598 = vmul.f32 %v1591, %v1596
    %1600 = vrot.lane.b32.xlu0 %v1598, 32
    %v1601 = vpop.permute.xlu0 %1600
    %v1603 = vadd.f32 %v1593, %v1601
    %v1604 = vtanh.pop %v1603
    %1606 = vrot.lane.b32.xlu0 %v1604, 64
    %v1607 = vpop.permute.xlu0 %1606
    %v1609 = vmul.f32 %v1591, %v1607
    %1610 = vrot.lane.b32.xlu0 %v1437, 96
    %v1611 = vpop.permute.xlu0 %1610
    %vm1613 = vcmask 913152
    %1614 = vst.msk [vmem:[%s3] sm:$0xf] %vm1613, %v1611
    %1616 = vrot.lane.b32.xlu0 %v1609, 96
    %v1617 = vpop.permute.xlu0 %1616
    %1619 = vst.msk [vmem:[%s4 + $0x4] sm:$0xf] %vm762, %v1617
    %v1620 = vmul.f32 %v1609, %v331
    %1622 = vrot.lane.b32.xlu0 %v1620, 32
    %v1623 = vpop.permute.xlu0 %1622
    %v1625 = vsel %vm327, %v1623, 0.0
    %1626 = vadd.xlane.f32.xlu0 %v1625
    %v1627 = vpop.xlane.xlu0 %1626
    %v1628 = vmul.f32 %v1603, %v118
    %1630 = vrot.lane.b32.xlu0 %v1628, 96
    %v1631 = vpop.permute.xlu0 %1630
    %v1633 = vsel %vm327, %v1631, 0.0
    %1634 = vadd.xlane.f32.xlu0 %v1633
    %v1635 = vpop.xlane.xlu0 %1634
    %v1636 = vadd.f32 %v114, %v1627
    %v1637 = vadd.f32 %v1636, %v1635
    %v1638 = vsel %vm133, %v1637, -inf
    %1639 = vmax.xlane.f32.xlu0 %v1638
    %v1640 = vpop.xlane.xlu0 %1639
    %v1641 = vsub.f32 %v1637, %v1640
    %v1642 = vmul.f32 %v1641, 1.442695
    %v1643 = vpow.pop %v1642
    %v1644 = vsel %vm133, %v1643, 0.0
    %1645 = vadd.xlane.f32.xlu0 %v1644
    %v1646 = vpop.xlane.xlu0 %1645
    %v1647 = vrcp.pop %v1646
    %v1648 = vmul.f32 %v1643, %v1647
    %1649 = vrot.lane.b32.xlu0 %v43, 16
    %v1650 = vpop.permute.xlu0 %1649
    %v1652 = vmul.f32 %v1648, %v1650
    %1653 = vrot.lane.b32.xlu0 %v1609, 32
    %v1654 = vpop.permute.xlu0 %1653
    %v1655 = vsel %vm120, %v1654, 0
    %1657 = vmatprep.subr.mxu0 0.0
    %1658 = vmatpush1.msra.mxu0 %v46
    %1659 = vmatprep.subr.mxu0 0.0
    %1660 = vmatpush1.msra.mxu0 %v47
    %1661 = vmatprep.subr.mxu0 0.0
    %1662 = vmatpush1.msra.mxu0 %v48
    %1663 = vmatprep.subr.mxu0 0.0
    %1664 = vmatpush1.msra.mxu0 %v49
    %1665 = vmatprep.subr.mxu0 0.0
    %1666 = vmatpush1.msra.mxu0 0.0
    %1667 = vmatprep.subr.mxu0 0.0
    %1668 = vmatpush1.msra.mxu0 0.0
    %1669 = vmatprep.subr.mxu0 0.0
    %1670 = vmatpush1.msra.mxu0 0.0
    %1671 = vmatprep.subr.mxu0 0.0
    %1672 = vmatpush1.msra.mxu0 0.0
    %1673 = vmatprep.subr.mxu0 0.0
    %1674 = vmatpush1.msra.mxu0 0.0
    %1675 = vmatprep.subr.mxu0 0.0
    %1676 = vmatpush1.msra.mxu0 0.0
    %1677 = vmatprep.subr.mxu0 0.0
    %1678 = vmatpush1.msra.mxu0 0.0
    %1679 = vmatprep.subr.mxu0 0.0
    %1680 = vmatpush1.msra.mxu0 0.0
    %1681 = vmatprep.subr.mxu0 0.0
    %1682 = vmatpush1.msra.mxu0 0.0
    %1683 = vmatprep.subr.mxu0 0.0
    %1684 = vmatpush1.msra.mxu0 0.0
    %1685 = vmatprep.subr.mxu0 0.0
    %1686 = vmatpush1.msra.mxu0 0.0
    %1687 = vmatprep.subr.mxu0 0.0
    %1688 = vmatpush1.msra.mxu0 0.0
    %1689 = vmatprep.subr.mxu0 0.0
    %1690 = vmatpush1.msra.mxu0 0.0
    %1691 = vmatprep.subr.mxu0 0.0
    %1692 = vmatpush1.msra.mxu0 0.0
    %1693 = vmatprep.subr.mxu0 0.0
    %1694 = vmatpush1.msra.mxu0 0.0
    %1695 = vmatprep.subr.mxu0 0.0
    %1696 = vmatpush1.msra.mxu0 0.0
    %1697 = vmatprep.subr.mxu0 0.0
    %1698 = vmatpush1.msra.mxu0 0.0
    %1699 = vmatprep.subr.mxu0 0.0
    %1700 = vmatpush1.msra.mxu0 0.0
    %1701 = vmatprep.subr.mxu0 0.0
    %1702 = vmatpush1.msra.mxu0 0.0
    %1703 = vmatprep.subr.mxu0 0.0
    %1704 = vmatpush1.msra.mxu0 0.0
    %1705 = vmatprep.subr.mxu0 0.0
    %1706 = vmatpush1.msra.mxu0 0.0
    %1707 = vmatprep.subr.mxu0 0.0
    %1708 = vmatpush1.msra.mxu0 0.0
    %1709 = vmatprep.subr.mxu0 0.0
    %1710 = vmatpush1.msra.mxu0 0.0
    %1711 = vmatprep.subr.mxu0 0.0
    %1712 = vmatpush1.msra.mxu0 0.0
    %1713 = vmatprep.subr.mxu0 0.0
    %1714 = vmatpush1.msra.mxu0 0.0
    %1715 = vmatprep.subr.mxu0 0.0
    %1716 = vmatpush1.msra.mxu0 0.0
    %1717 = vmatprep.subr.mxu0 0.0
    %1718 = vmatpush1.msra.mxu0 0.0
    %1719 = vmatprep.subr.mxu0 0.0
    %1720 = vmatpush1.msra.mxu0 0.0
    %1721 = vmatprep.mubr.f32.mxu0 0.0
    %1722 = vmatmul.mubr.f32.gmra.mrb[0].mxu0 %v1655
    %v1723 = vpop.f32.mrb[0].mxu0
    %v1724 = vadd.f32 0.0, %v1723
    %v1725 = vpop.f32.mrb[0].mxu0
    %1726 = vdwg.mxu0
    %v1728 = vsel %vm219, %v1652, 0
    %1730 = vmatprep.subr.mxu0 0.0
    %1731 = vmatpush1.msra.mxu0 %v44
    %1732 = vmatprep.subr.mxu0 0.0
    %1733 = vmatpush1.msra.mxu0 %v45
    %1734 = vmatprep.subr.mxu0 0.0
    %1735 = vmatpush1.msra.mxu0 0.0
    %1736 = vmatprep.subr.mxu0 0.0
    %1737 = vmatpush1.msra.mxu0 0.0
    %1738 = vmatprep.subr.mxu0 0.0
    %1739 = vmatpush1.msra.mxu0 0.0
    %1740 = vmatprep.subr.mxu0 0.0
    %1741 = vmatpush1.msra.mxu0 0.0
    %1742 = vmatprep.subr.mxu0 0.0
    %1743 = vmatpush1.msra.mxu0 0.0
    %1744 = vmatprep.subr.mxu0 0.0
    %1745 = vmatpush1.msra.mxu0 0.0
    %1746 = vmatprep.subr.mxu0 0.0
    %1747 = vmatpush1.msra.mxu0 0.0
    %1748 = vmatprep.subr.mxu0 0.0
    %1749 = vmatpush1.msra.mxu0 0.0
    %1750 = vmatprep.subr.mxu0 0.0
    %1751 = vmatpush1.msra.mxu0 0.0
    %1752 = vmatprep.subr.mxu0 0.0
    %1753 = vmatpush1.msra.mxu0 0.0
    %1754 = vmatprep.subr.mxu0 0.0
    %1755 = vmatpush1.msra.mxu0 0.0
    %1756 = vmatprep.subr.mxu0 0.0
    %1757 = vmatpush1.msra.mxu0 0.0
    %1758 = vmatprep.subr.mxu0 0.0
    %1759 = vmatpush1.msra.mxu0 0.0
    %1760 = vmatprep.subr.mxu0 0.0
    %1761 = vmatpush1.msra.mxu0 0.0
    %1762 = vmatprep.subr.mxu0 0.0
    %1763 = vmatpush1.msra.mxu0 0.0
    %1764 = vmatprep.subr.mxu0 0.0
    %1765 = vmatpush1.msra.mxu0 0.0
    %1766 = vmatprep.subr.mxu0 0.0
    %1767 = vmatpush1.msra.mxu0 0.0
    %1768 = vmatprep.subr.mxu0 0.0
    %1769 = vmatpush1.msra.mxu0 0.0
    %1770 = vmatprep.subr.mxu0 0.0
    %1771 = vmatpush1.msra.mxu0 0.0
    %1772 = vmatprep.subr.mxu0 0.0
    %1773 = vmatpush1.msra.mxu0 0.0
    %1774 = vmatprep.subr.mxu0 0.0
    %1775 = vmatpush1.msra.mxu0 0.0
    %1776 = vmatprep.subr.mxu0 0.0
    %1777 = vmatpush1.msra.mxu0 0.0
    %1778 = vmatprep.subr.mxu0 0.0
    %1779 = vmatpush1.msra.mxu0 0.0
    %1780 = vmatprep.subr.mxu0 0.0
    %1781 = vmatpush1.msra.mxu0 0.0
    %1782 = vmatprep.subr.mxu0 0.0
    %1783 = vmatpush1.msra.mxu0 0.0
    %1784 = vmatprep.subr.mxu0 0.0
    %1785 = vmatpush1.msra.mxu0 0.0
    %1786 = vmatprep.subr.mxu0 0.0
    %1787 = vmatpush1.msra.mxu0 0.0
    %1788 = vmatprep.subr.mxu0 0.0
    %1789 = vmatpush1.msra.mxu0 0.0
    %1790 = vmatprep.subr.mxu0 0.0
    %1791 = vmatpush1.msra.mxu0 0.0
    %1792 = vmatprep.subr.mxu0 0.0
    %1793 = vmatpush1.msra.mxu0 0.0
    %1794 = vmatprep.mubr.f32.mxu0 0.0
    %1795 = vmatmul.mubr.f32.gmra.mrb[0].mxu0 %v1728
    %v1796 = vpop.f32.mrb[0].mxu0
    %v1797 = vadd.f32 %v1724, %v1796
    %v1798 = vpop.f32.mrb[0].mxu0
    %1799 = vdwg.mxu0
    %v1800 = vadd.f32 %v1797, %v296
    %v1801 = vxor.u32 %v1800, 2147483648
    %v1802 = vmul.f32 %v1801, 1.442695
    %v1803 = vpow.pop %v1802
    %v1804 = vadd.f32 %v1803, 1.0
    %v1805 = vrcp.pop %v1804
    %v1806 = vmul.f32 1.0, %v1805
    %v1807 = vtanh.pop %v1800
    %v1808 = vmul.f32 %v1806, %v1603
    %1810 = vrot.lane.b32.xlu0 %v1807, 64
    %v1811 = vpop.permute.xlu0 %1810
    %v1813 = vmul.f32 %v1806, %v1811
    %1815 = vrot.lane.b32.xlu0 %v1813, 32
    %v1816 = vpop.permute.xlu0 %1815
    %v1818 = vadd.f32 %v1808, %v1816
    %v1819 = vtanh.pop %v1818
    %1821 = vrot.lane.b32.xlu0 %v1819, 64
    %v1822 = vpop.permute.xlu0 %1821
    %v1824 = vmul.f32 %v1806, %v1822
    %1825 = vrot.lane.b32.xlu0 %v1652, 112
    %v1826 = vpop.permute.xlu0 %1825
    %vm1828 = vcmask 1044352
    %1829 = vst.msk [vmem:[%s3] sm:$0xf] %vm1828, %v1826
    %1830 = vst.msk [vmem:[%s4 + $0x4] sm:$0xf] %vm974, %v1824
    // Predicated region
    $region22: #{encoder_forward.1} parent=1 // pred_check
      _
    $region23: #{encoder_forward.1} parent=1 // pred_check_branch
      %1832 = sbr.rel (0) target = $region25
    $region24: #{encoder_forward.1} parent=1 // pred_region
      _
    $region25: #{encoder_forward.1} parent=1 // pred_fallthru
      _
    // Predicated region
    $region26: #{encoder_forward.1} parent=1 // pred_check
      _
    $region27: #{encoder_forward.1} parent=1 // pred_check_branch
      %1834 = sbr.rel (0) target = $region29
    $region28: #{encoder_forward.1} parent=1 // pred_region
      _
    $region29: #{encoder_forward.1} parent=1 // pred_fallthru
      _
    // Predicated region
    $region30: #{encoder_forward.1} parent=1 // pred_check
      _
    $region31: #{encoder_forward.1} parent=1 // pred_check_branch
      %1836 = sbr.rel (0) target = $region33
    $region32: #{encoder_forward.1} parent=1 // pred_region
      _
    $region33: #{encoder_forward.1} parent=1 // pred_fallthru
      _
    // Predicated region
    $region34: #{encoder_forward.1} parent=1 // pred_check
      _
    $region35: #{encoder_forward.1} parent=1 // pred_check_branch
      %1838 = sbr.rel (0) target = $region37
    $region36: #{encoder_forward.1} parent=1 // pred_region
      _
    $region37: #{encoder_forward.1} parent=1 // pred_fallthru
      _
    %1839 = vsyncpa [#allocation3], 1
    %1840 = vsyncpa [#allocation4], 1

</llo_original>
